<compile_context>
chip_gen: v7x
topology: tpu7x:2x2x1
jax: 0.10.0
libtpu: 0.0.40
codegen_flags: <defaults>
</compile_context>

<pallas_src>
import functools

import jax
import jax.numpy as jnp
from jax.experimental import pallas as pl
from jax.experimental.pallas import tpu as pltpu


_LN_EPS = 1e-5
_MASK = -1e30  # fill for padded softmax lanes; exp(mask - max) underflows to exactly 0


def _cdiv(a, b):
    return -(-a // b)


def _round_up(x, m):
    return _cdiv(x, m) * m


def _aux_heads_kernel(
    s_ref,       # (TM, c_in)          input rows (any float dtype)
    w1_ref,      # (c_in, c_hidden)    LN-affine folded, matmul dtype
    b1_ref,      # (1, c_hidden)       LN-affine folded, f32
    w2_ref,      # (c_hidden, c_hidden)
    b2_ref,      # (1, c_hidden)
    w3_ref,      # (c_hidden, PB)      PB = no_bins padded to a 128 multiple
    b3_ref,      # (1, PB)             padded lanes hold 0
    bins_ref,    # (1, PB)             bin centers, padded lanes hold 0
    logits_ref,  # (TM, PB)            lanes [0:no_bins] are the real logits
    plddt_ref,   # (TM, 1)             per-residue pLDDT
    *,
    no_bins,
    precision,
):
    x = s_ref[...].astype(jnp.float32)

    # --- LayerNorm statistics (two-pass / centered variance: robust to large offsets,
    #     matches nn.LayerNorm with eps=1e-5).  Affine is folded into w1/b1. ---
    mean = jnp.mean(x, axis=-1, keepdims=True)
    xc = x - mean
    var = jnp.mean(xc * xc, axis=-1, keepdims=True)
    xn = xc * jax.lax.rsqrt(var + _LN_EPS)

    # --- linear_1 (+ folded LN affine) + ReLU ---
    h = jnp.dot(xn.astype(w1_ref.dtype), w1_ref[...],
                preferred_element_type=jnp.float32, precision=precision)
    h = jnp.maximum(h + b1_ref[...], 0.0)

    # --- linear_2 + ReLU ---
    h = jnp.dot(h.astype(w2_ref.dtype), w2_ref[...],
                preferred_element_type=jnp.float32, precision=precision)
    h = jnp.maximum(h + b2_ref[...], 0.0)

    # --- linear_3 -> logits (pad lanes get 0: zero weight columns + zero pad bias) ---
    logits = jnp.dot(h.astype(w3_ref.dtype), w3_ref[...],
                     preferred_element_type=jnp.float32, precision=precision)
    logits = logits + b3_ref[...]

    # --- compute_plddt: masked softmax over the real bins, expectation of centers*100 ---
    lane = jax.lax.broadcasted_iota(jnp.int32, logits.shape, dimension=1)
    masked = jnp.where(lane < no_bins, logits, _MASK)
    m = jnp.max(masked, axis=-1, keepdims=True)
    e = jnp.exp(masked - m)                      # pad lanes underflow to exactly 0
    denom = jnp.sum(e, axis=-1, keepdims=True)
    probs = e * (1.0 / denom)                    # exact reciprocal (approx EUP rcp was
                                                 # the source of the pLDDT error)
    plddt = jnp.sum(probs * bins_ref[...], axis=-1, keepdims=True) * 100.0

    logits_ref[...] = logits.astype(logits_ref.dtype)
    plddt_ref[...] = plddt.astype(plddt_ref.dtype)


def auxiliary_heads_forward(
    s,
    params,
    *,
    tm=1024,
    matmul_dtype=jnp.bfloat16,
    out_dtype=jnp.float32,
    min_grid_steps=2,
    vmem_budget_bytes=12 * 1024 * 1024,
    vmem_limit_bytes=None,
    interpret=False,
):
    """s: [batch, N_res, c_in]. Returns dict with 'lddt_logits' and 'plddt'.

    tm: row tile (rows of batch*N_res per grid step). Sweep 1024/2048 on real shapes.
    The wrapper (a) rounds tm to the dtype sublane tile (8 f32 / 16 bf16 / 32 int8),
    (b) caps tm so the grid has >= min_grid_steps steps (keeps both v7x TensorCores
    busy), and (c) clamps tm against vmem_budget_bytes (default 12 MiB, which fits the
    v5e 16 MiB scoped-VMEM default). On v6e/v7x raise vmem_budget_bytes (and pass
    vmem_limit_bytes) to push tm to 2048; prefer bf16 input to double the feasible tm
    on v7x's 64 MiB physical VMEM.
    """
    batch, n_res, c_in = s.shape
    c_hidden = params["w1"].shape[1]
    no_bins = params["w3"].shape[1]
    f32 = jnp.float32

    M = batch * n_res
    in_itemsize = jnp.dtype(s.dtype).itemsize
    out_itemsize = jnp.dtype(out_dtype).itemsize
    w_itemsize = jnp.dtype(matmul_dtype).itemsize
    # dtype-dependent sublane packing: f32 -> 8 rows, bf16 -> 16, int8/fp8 -> 32
    row_align = max(8, 32 // in_itemsize, 32 // out_itemsize)
    pad_bins = int(_round_up(no_bins, 128))

    # --- tile selection -------------------------------------------------------------
    M_up = int(_round_up(M, row_align))
    # keep at least `min_grid_steps` grid steps so megacore sharding has work per core
    tm_cap = max(row_align,
                 int(_round_up(_cdiv(M_up, max(1, min_grid_steps)), row_align)))
    tm = max(row_align, int(_round_up(min(int(tm), tm_cap), row_align)))

    def vmem_estimate(t):
        blocks = 2 * t * c_in * in_itemsize                      # double-buffered input
        blocks += 2 * t * (pad_bins + 1) * out_itemsize          # double-buffered outputs
        param_b = 2 * (c_in * c_hidden + c_hidden * c_hidden
                       + c_hidden * pad_bins) * w_itemsize
        param_b += 2 * (2 * c_hidden + 2 * pad_bins) * 4
        temps = t * (2 * c_in + 2 * c_hidden + 3 * pad_bins) * 4  # rough f32 temporaries
        return blocks + param_b + temps

    while tm > row_align and vmem_estimate(tm) > vmem_budget_bytes:
        tm = max(row_align, int(_round_up(tm // 2, row_align)))

    M_pad = int(_round_up(M, tm))
    grid = (M_pad // tm,)

    s2d = s.reshape(M, c_in)
    if M_pad != M:
        # Zero rows are harmless: LN of zeros is finite, results are sliced away.
        s2d = jnp.pad(s2d, ((0, M_pad - M), (0, 0)))

    # --- parameter prep (one-time, outside the hot loop) -----------------------------
    gamma = params["ln_gamma"].astype(f32).reshape(1, c_in)
    beta = params["ln_beta"].astype(f32).reshape(1, c_in)
    w1 = params["w1"].astype(f32)
    b1 = params["b1"].astype(f32).reshape(1, c_hidden)
    w2 = params["w2"].astype(f32)
    b2 = params["b2"].astype(f32).reshape(1, c_hidden)
    w3 = params["w3"].astype(f32)
    b3 = params["b3"].astype(f32).reshape(1, no_bins)
    bins = params["bins"].astype(f32).reshape(1, no_bins)

    # Fold the LayerNorm affine into linear_1 (mathematically identical).
    w1f = gamma.reshape(c_in, 1) * w1
    b1f = beta @ w1 + b1

    # bf16 (default) MXU operands; biases / bins stay f32 (added after f32 accumulation).
    w1m = w1f.astype(matmul_dtype)
    w2m = w2.astype(matmul_dtype)
    w3m = jnp.pad(w3, ((0, 0), (0, pad_bins - no_bins))).astype(matmul_dtype)
    b3p = jnp.pad(b3, ((0, 0), (0, pad_bins - no_bins)))
    binsp = jnp.pad(bins, ((0, 0), (0, pad_bins - no_bins)))

    precision = (jax.lax.Precision.HIGHEST
                 if jnp.dtype(matmul_dtype) == jnp.dtype(jnp.float32) else None)
    kernel = functools.partial(_aux_heads_kernel, no_bins=no_bins, precision=precision)

    def const_spec(shape):
        # Constant index_map -> pipeline keeps these resident in VMEM (no re-DMA per tile).
        return pl.BlockSpec(shape, lambda i: (0, 0))

    logits_pad, plddt_pad = pl.pallas_call(
        kernel,
        grid_spec=pltpu.PrefetchScalarGridSpec(
            num_scalar_prefetch=0,
            grid=grid,
            in_specs=[
                pl.BlockSpec((tm, c_in), lambda i: (i, 0)),   # s rows
                const_spec((c_in, c_hidden)),                 # w1 (LN-folded)
                const_spec((1, c_hidden)),                    # b1 (LN-folded)
                const_spec((c_hidden, c_hidden)),             # w2
                const_spec((1, c_hidden)),                    # b2
                const_spec((c_hidden, pad_bins)),             # w3 (lane-padded)
                const_spec((1, pad_bins)),                    # b3 (lane-padded)
                const_spec((1, pad_bins)),                    # bin centers (lane-padded)
            ],
            out_specs=(
                pl.BlockSpec((tm, pad_bins), lambda i: (i, 0)),  # lane-dense logits slab
                pl.BlockSpec((tm, 1), lambda i: (i, 0)),         # tiny pLDDT column
            ),
        ),
        out_shape=(
            jax.ShapeDtypeStruct((M_pad, pad_bins), out_dtype),
            jax.ShapeDtypeStruct((M_pad, 1), out_dtype),
        ),
        compiler_params=pltpu.CompilerParams(
            dimension_semantics=("parallel",),
            vmem_limit_bytes=vmem_limit_bytes,
        ),
        interpret=interpret,
    )(s2d, w1m, b1f, w2m, b2, w3m, b3p, binsp)

    # Each output is read back exactly once (no double read of a packed slab).
    lddt_logits = logits_pad[:M, :no_bins].reshape(batch, n_res, no_bins)
    plddt = plddt_pad[:M, 0].reshape(batch, n_res)
    return {"lddt_logits": lddt_logits, "plddt": plddt}


def init_params(key, c_in, c_hidden, no_bins):
    """Deterministic synthetic init mirroring the module's __init__.

    Weights are stored already transposed to (in, out) for x @ W use in the kernel
    (torch nn.Linear stores (out, in))."""
    k1, k2 = jax.random.split(key, 2)
    w1 = jax.random.normal(k1, (c_in, c_hidden), jnp.float32) * jnp.sqrt(2.0 / c_in)
    w2 = jax.random.normal(k2, (c_hidden, c_hidden), jnp.float32) * jnp.sqrt(2.0 / c_hidden)
    w3 = jnp.zeros((c_hidden, no_bins), jnp.float32)   # final_init_ -> zeros
    return {
        "ln_gamma": jnp.ones((1, c_in), jnp.float32),
        "ln_beta": jnp.zeros((1, c_in), jnp.float32),
        "w1": w1, "b1": jnp.zeros((1, c_hidden), jnp.float32),
        "w2": w2, "b2": jnp.zeros((1, c_hidden), jnp.float32),
        "w3": w3, "b3": jnp.zeros((1, no_bins), jnp.float32),
        # compute_plddt bin centers: (arange(no_bins) + 0.5) / no_bins
        "bins": ((jnp.arange(no_bins, dtype=jnp.float32) + 0.5) / no_bins
                 ).reshape(1, no_bins),
    }


def _reference_forward(s, params):
    """Plain-JAX reference (module semantics, full f32 matmul precision)."""
    hp = jax.lax.Precision.HIGHEST
    x = s.astype(jnp.float32)
    mean = jnp.mean(x, axis=-1, keepdims=True)
    var = jnp.mean(jnp.square(x - mean), axis=-1, keepdims=True)
    xn = (x - mean) / jnp.sqrt(var + _LN_EPS)
    xn = xn * params["ln_gamma"][0] + params["ln_beta"][0]
    h = jax.nn.relu(jnp.dot(xn, params["w1"], precision=hp) + params["b1"][0])
    h = jax.nn.relu(jnp.dot(h, params["w2"], precision=hp) + params["b2"][0])
    logits = jnp.dot(h, params["w3"], precision=hp) + params["b3"][0]
    probs = jax.nn.softmax(logits, axis=-1)
    plddt = jnp.sum(probs * params["bins"][0], axis=-1) * 100.0
    return logits, plddt


if __name__ == "__main__":
    # Small shapes consistent with outputs['sm']['single']: [batch, N_res, c_in]
    batch, n_res, c_in, c_hidden, no_bins = 2, 8, 32, 16, 50

    key = jax.random.PRNGKey(0)
    ks, kp = jax.random.split(key)
    s = jax.random.normal(ks, (batch, n_res, c_in), jnp.float32)
    params = init_params(kp, c_in, c_hidden, no_bins)

    # For the numerical check: perturb the zero-initialized final layer (non-degenerate
    # softmax) and the LN affine (so the w1 fold is actually exercised).
    k3, k4, k5, k6 = jax.random.split(kp, 4)
    params["w3"] = 0.1 * jax.random.normal(k3, (c_hidden, no_bins), jnp.float32)
    params["b3"] = 0.1 * jax.random.normal(k4, (1, no_bins), jnp.float32)
    params["ln_gamma"] = 1.0 + 0.1 * jax.random.normal(k5, (1, c_in), jnp.float32)
    params["ln_beta"] = 0.1 * jax.random.normal(k6, (1, c_in), jnp.float32)

    ref_logits, ref_plddt = _reference_forward(s, params)

    # 1) Exact path: f32 MXU operands, tight check against module semantics.
    out_f32 = auxiliary_heads_forward(s, params, matmul_dtype=jnp.float32)
    jax.block_until_ready(out_f32)
    assert out_f32["lddt_logits"].shape == (batch, n_res, no_bins)
    assert out_f32["plddt"].shape == (batch, n_res)
    assert jnp.allclose(out_f32["lddt_logits"], ref_logits, atol=1e-3, rtol=1e-3)
    assert jnp.allclose(out_f32["plddt"], ref_plddt, atol=2e-2, rtol=0.0)

    # 2) Fast path (default): bf16 MXU operands with f32 accumulation.
    out_bf16 = auxiliary_heads_forward(s, params)
    jax.block_until_ready(out_bf16)
    assert out_bf16["lddt_logits"].shape == (batch, n_res, no_bins)
    assert out_bf16["plddt"].shape == (batch, n_res)
    assert jnp.allclose(out_bf16["lddt_logits"], ref_logits, atol=5e-2, rtol=5e-2)
    assert jnp.allclose(out_bf16["plddt"], ref_plddt, atol=0.5, rtol=0.0)

    print("KERNEL_OK")
</pallas_src>

<mosaic_0001>
module attributes {stable_mosaic.version = 11 : i64} {
  func.func @_aux_heads_kernel(%arg0: i32, %arg1: memref<8x32xf32, #tpu.memory_space<vmem>>, %arg2: memref<32x16xf32, #tpu.memory_space<vmem>>, %arg3: memref<1x16xf32, #tpu.memory_space<vmem>>, %arg4: memref<16x16xf32, #tpu.memory_space<vmem>>, %arg5: memref<1x16xf32, #tpu.memory_space<vmem>>, %arg6: memref<16x128xf32, #tpu.memory_space<vmem>>, %arg7: memref<1x128xf32, #tpu.memory_space<vmem>>, %arg8: memref<1x128xf32, #tpu.memory_space<vmem>>, %arg9: memref<8x128xf32, #tpu.memory_space<vmem>>, %arg10: memref<8x1xf32, #tpu.memory_space<vmem>>) attributes {dimension_semantics = [#tpu.dimension_semantics<parallel>], iteration_bounds = array<i64: 2>, scalar_prefetch = 0 : i64, scratch_operands = 0 : i64, tpu.core_type = #tpu.core_type<tc>, window_params = [{transform_indices = @transform_0, window_bounds = array<i64: 8, 32>}, {pipeline_mode = #tpu.pipeline_mode<synchronous>, transform_indices = @transform_1, window_bounds = array<i64: 32, 16>}, {pipeline_mode = #tpu.pipeline_mode<synchronous>, transform_indices = @transform_2, window_bounds = array<i64: 1, 16>}, {pipeline_mode = #tpu.pipeline_mode<synchronous>, transform_indices = @transform_3, window_bounds = array<i64: 16, 16>}, {pipeline_mode = #tpu.pipeline_mode<synchronous>, transform_indices = @transform_4, window_bounds = array<i64: 1, 16>}, {pipeline_mode = #tpu.pipeline_mode<synchronous>, transform_indices = @transform_5, window_bounds = array<i64: 16, 128>}, {pipeline_mode = #tpu.pipeline_mode<synchronous>, transform_indices = @transform_6, window_bounds = array<i64: 1, 128>}, {pipeline_mode = #tpu.pipeline_mode<synchronous>, transform_indices = @transform_7, window_bounds = array<i64: 1, 128>}, {transform_indices = @transform_8, window_bounds = array<i64: 8, 128>}, {transform_indices = @transform_9, window_bounds = array<i64: 8, 1>}]} {
    %c0 = arith.constant 0 : index
    %c0_0 = arith.constant 0 : index
    %0 = vector.load %arg1[%c0, %c0_0] : memref<8x32xf32, #tpu.memory_space<vmem>>, vector<8x32xf32>
    %cst = arith.constant dense<0.000000e+00> : vector<8xf32>
    %1 = vector.multi_reduction <add>, %0, %cst [1] : vector<8x32xf32> to vector<8xf32>
    %2 = vector.shape_cast %1 : vector<8xf32> to vector<8x1xf32>
    %cst_1 = arith.constant 3.200000e+01 : f32
    %3 = vector.broadcast %cst_1 : f32 to vector<8x1xf32>
    %4 = arith.divf %2, %3 : vector<8x1xf32>
    %5 = vector.broadcast %4 : vector<8x1xf32> to vector<8x32xf32>
    %6 = arith.subf %0, %5 : vector<8x32xf32>
    %7 = arith.mulf %6, %6 : vector<8x32xf32>
    %cst_2 = arith.constant dense<0.000000e+00> : vector<8xf32>
    %8 = vector.multi_reduction <add>, %7, %cst_2 [1] : vector<8x32xf32> to vector<8xf32>
    %9 = vector.shape_cast %8 : vector<8xf32> to vector<8x1xf32>
    %cst_3 = arith.constant 3.200000e+01 : f32
    %10 = vector.broadcast %cst_3 : f32 to vector<8x1xf32>
    %11 = arith.divf %9, %10 : vector<8x1xf32>
    %cst_4 = arith.constant 9.99999974E-6 : f32
    %12 = vector.broadcast %cst_4 : f32 to vector<8x1xf32>
    %13 = arith.addf %11, %12 : vector<8x1xf32>
    %14 = math.rsqrt %13 : vector<8x1xf32>
    %15 = vector.broadcast %14 : vector<8x1xf32> to vector<8x32xf32>
    %16 = arith.mulf %6, %15 : vector<8x32xf32>
    %c0_5 = arith.constant 0 : index
    %c0_6 = arith.constant 0 : index
    %17 = vector.load %arg2[%c0_5, %c0_6] : memref<32x16xf32, #tpu.memory_space<vmem>>, vector<32x16xf32>
    %cst_7 = arith.constant dense<0.000000e+00> : vector<8x16xf32>
    %18 = tpu.matmul %16, %17, %cst_7 {dimension_numbers = #tpu.dot_dimension_numbers<[1], [0], [0], [1], [0, 0, 1, 1], [], []>, precision = #tpu.contract_precision<fp32>} : vector<8x32xf32>, vector<32x16xf32>, vector<8x16xf32> -> vector<8x16xf32>
    %c0_8 = arith.constant 0 : index
    %c0_9 = arith.constant 0 : index
    %19 = vector.load %arg3[%c0_8, %c0_9] : memref<1x16xf32, #tpu.memory_space<vmem>>, vector<1x16xf32>
    %20 = vector.broadcast %19 : vector<1x16xf32> to vector<8x16xf32>
    %21 = arith.addf %18, %20 : vector<8x16xf32>
    %cst_10 = arith.constant 0.000000e+00 : f32
    %22 = vector.broadcast %cst_10 : f32 to vector<8x16xf32>
    %23 = arith.maximumf %21, %22 : vector<8x16xf32>
    %c0_11 = arith.constant 0 : index
    %c0_12 = arith.constant 0 : index
    %24 = vector.load %arg4[%c0_11, %c0_12] : memref<16x16xf32, #tpu.memory_space<vmem>>, vector<16x16xf32>
    %cst_13 = arith.constant dense<0.000000e+00> : vector<8x16xf32>
    %25 = tpu.matmul %23, %24, %cst_13 {dimension_numbers = #tpu.dot_dimension_numbers<[1], [0], [0], [1], [0, 0, 1, 1], [], []>, precision = #tpu.contract_precision<fp32>} : vector<8x16xf32>, vector<16x16xf32>, vector<8x16xf32> -> vector<8x16xf32>
    %c0_14 = arith.constant 0 : index
    %c0_15 = arith.constant 0 : index
    %26 = vector.load %arg5[%c0_14, %c0_15] : memref<1x16xf32, #tpu.memory_space<vmem>>, vector<1x16xf32>
    %27 = vector.broadcast %26 : vector<1x16xf32> to vector<8x16xf32>
    %28 = arith.addf %25, %27 : vector<8x16xf32>
    %cst_16 = arith.constant 0.000000e+00 : f32
    %29 = vector.broadcast %cst_16 : f32 to vector<8x16xf32>
    %30 = arith.maximumf %28, %29 : vector<8x16xf32>
    %c0_17 = arith.constant 0 : index
    %c0_18 = arith.constant 0 : index
    %31 = vector.load %arg6[%c0_17, %c0_18] : memref<16x128xf32, #tpu.memory_space<vmem>>, vector<16x128xf32>
    %cst_19 = arith.constant dense<0.000000e+00> : vector<8x128xf32>
    %32 = tpu.matmul %30, %31, %cst_19 {dimension_numbers = #tpu.dot_dimension_numbers<[1], [0], [0], [1], [0, 0, 1, 1], [], []>, precision = #tpu.contract_precision<fp32>} : vector<8x16xf32>, vector<16x128xf32>, vector<8x128xf32> -> vector<8x128xf32>
    %c0_20 = arith.constant 0 : index
    %c0_21 = arith.constant 0 : index
    %33 = vector.load %arg7[%c0_20, %c0_21] : memref<1x128xf32, #tpu.memory_space<vmem>>, vector<1x128xf32>
    %34 = vector.broadcast %33 : vector<1x128xf32> to vector<8x128xf32>
    %35 = arith.addf %32, %34 : vector<8x128xf32>
    %36 = tpu.iota {dimensions = array<i32: 1>} : vector<8x128xi32>
    %c50_i32 = arith.constant 50 : i32
    %37 = vector.broadcast %c50_i32 : i32 to vector<8x128xi32>
    %38 = arith.cmpi slt, %36, %37 : vector<8x128xi32>
    %cst_22 = arith.constant -1.000000e+30 : f32
    %39 = vector.broadcast %cst_22 : f32 to vector<8x128xf32>
    %40 = arith.select %38, %35, %39 : vector<8x128xi1>, vector<8x128xf32>
    %cst_23 = arith.constant dense<0xFF800000> : vector<8xf32>
    %41 = vector.multi_reduction <maximumf>, %40, %cst_23 [1] : vector<8x128xf32> to vector<8xf32>
    %42 = vector.shape_cast %41 : vector<8xf32> to vector<8x1xf32>
    %43 = vector.broadcast %42 : vector<8x1xf32> to vector<8x128xf32>
    %44 = arith.subf %40, %43 : vector<8x128xf32>
    %45 = math.exp %44 : vector<8x128xf32>
    %cst_24 = arith.constant dense<0.000000e+00> : vector<8xf32>
    %46 = vector.multi_reduction <add>, %45, %cst_24 [1] : vector<8x128xf32> to vector<8xf32>
    %47 = vector.shape_cast %46 : vector<8xf32> to vector<8x1xf32>
    %cst_25 = arith.constant 1.000000e+00 : f32
    %48 = vector.broadcast %cst_25 : f32 to vector<8x1xf32>
    %49 = arith.divf %48, %47 : vector<8x1xf32>
    %50 = vector.broadcast %49 : vector<8x1xf32> to vector<8x128xf32>
    %51 = arith.mulf %45, %50 : vector<8x128xf32>
    %c0_26 = arith.constant 0 : index
    %c0_27 = arith.constant 0 : index
    %52 = vector.load %arg8[%c0_26, %c0_27] : memref<1x128xf32, #tpu.memory_space<vmem>>, vector<1x128xf32>
    %53 = vector.broadcast %52 : vector<1x128xf32> to vector<8x128xf32>
    %54 = arith.mulf %51, %53 : vector<8x128xf32>
    %cst_28 = arith.constant dense<0.000000e+00> : vector<8xf32>
    %55 = vector.multi_reduction <add>, %54, %cst_28 [1] : vector<8x128xf32> to vector<8xf32>
    %56 = vector.shape_cast %55 : vector<8xf32> to vector<8x1xf32>
    %cst_29 = arith.constant 1.000000e+02 : f32
    %57 = vector.broadcast %cst_29 : f32 to vector<8x1xf32>
    %58 = arith.mulf %56, %57 : vector<8x1xf32>
    %c0_30 = arith.constant 0 : index
    %c0_31 = arith.constant 0 : index
    %59 = vector.load %arg9[%c0_30, %c0_31] : memref<8x128xf32, #tpu.memory_space<vmem>>, vector<8x128xf32>
    tpu.vector_store %arg9[%c0_30, %c0_31], %35 {strides = array<i32>} : memref<8x128xf32, #tpu.memory_space<vmem>>, vector<8x128xf32>,
    %c0_32 = arith.constant 0 : index
    %c0_33 = arith.constant 0 : index
    %60 = vector.load %arg10[%c0_32, %c0_33] : memref<8x1xf32, #tpu.memory_space<vmem>>, vector<8x1xf32>
    tpu.vector_store %arg10[%c0_32, %c0_33], %58 {strides = array<i32>} : memref<8x1xf32, #tpu.memory_space<vmem>>, vector<8x1xf32>,
    return
  }
  func.func @transform_0(%arg0: i32) -> (i32, i32) {
    %c0_i32 = arith.constant 0 : i32
    %c0_i32_0 = arith.constant 0 : i32
    return %arg0, %c0_i32 : i32, i32
  }
  func.func @transform_1(%arg0: i32) -> (i32, i32) {
    %c0_i32 = arith.constant 0 : i32
    %c0_i32_0 = arith.constant 0 : i32
    %c0_i32_1 = arith.constant 0 : i32
    return %c0_i32, %c0_i32_0 : i32, i32
  }
  func.func @transform_2(%arg0: i32) -> (i32, i32) {
    %c0_i32 = arith.constant 0 : i32
    %c0_i32_0 = arith.constant 0 : i32
    %c0_i32_1 = arith.constant 0 : i32
    return %c0_i32, %c0_i32_0 : i32, i32
  }
  func.func @transform_3(%arg0: i32) -> (i32, i32) {
    %c0_i32 = arith.constant 0 : i32
    %c0_i32_0 = arith.constant 0 : i32
    %c0_i32_1 = arith.constant 0 : i32
    return %c0_i32, %c0_i32_0 : i32, i32
  }
  func.func @transform_4(%arg0: i32) -> (i32, i32) {
    %c0_i32 = arith.constant 0 : i32
    %c0_i32_0 = arith.constant 0 : i32
    %c0_i32_1 = arith.constant 0 : i32
    return %c0_i32, %c0_i32_0 : i32, i32
  }
  func.func @transform_5(%arg0: i32) -> (i32, i32) {
    %c0_i32 = arith.constant 0 : i32
    %c0_i32_0 = arith.constant 0 : i32
    %c0_i32_1 = arith.constant 0 : i32
    return %c0_i32, %c0_i32_0 : i32, i32
  }
  func.func @transform_6(%arg0: i32) -> (i32, i32) {
    %c0_i32 = arith.constant 0 : i32
    %c0_i32_0 = arith.constant 0 : i32
    %c0_i32_1 = arith.constant 0 : i32
    return %c0_i32, %c0_i32_0 : i32, i32
  }
  func.func @transform_7(%arg0: i32) -> (i32, i32) {
    %c0_i32 = arith.constant 0 : i32
    %c0_i32_0 = arith.constant 0 : i32
    %c0_i32_1 = arith.constant 0 : i32
    return %c0_i32, %c0_i32_0 : i32, i32
  }
  func.func @transform_8(%arg0: i32) -> (i32, i32) {
    %c0_i32 = arith.constant 0 : i32
    %c0_i32_0 = arith.constant 0 : i32
    return %arg0, %c0_i32 : i32, i32
  }
  func.func @transform_9(%arg0: i32) -> (i32, i32) {
    %c0_i32 = arith.constant 0 : i32
    %c0_i32_0 = arith.constant 0 : i32
    return %arg0, %c0_i32 : i32, i32
  }
}

</mosaic_0001>

<llo_original>
// kernel: tpu_custom_call.1
$region0: #{tpu_custom_call.1}
  #allocation0 [shape = 'u32[]', space=smem, size = 0x4, offset = 0x4, fixed_abs, tag = 'smem constant byte address 0x4 - core index']
  #allocation1 [shape = 'u32[144,128]{1,0:T(1,128)}', space=vmem, size = 0x12000, scoped, tag = 'internal scratch']
  %s0 = inlined_call_operand.vmem [shape: f32[16,32], index: 0, kind: input, shape index: {}]
  %s1 = inlined_call_operand.vmem [shape: f32[32,16], index: 1, kind: input, shape index: {}]
  %s2 = inlined_call_operand.vmem [shape: f32[1,16], index: 2, kind: input, shape index: {}]
  %s3 = inlined_call_operand.vmem [shape: f32[16,16], index: 3, kind: input, shape index: {}]
  %s4 = inlined_call_operand.vmem [shape: f32[1,16], index: 4, kind: input, shape index: {}]
  %s5 = inlined_call_operand.vmem [shape: f32[16,128], index: 5, kind: input, shape index: {}]
  %s6 = inlined_call_operand.vmem [shape: f32[1,128], index: 6, kind: input, shape index: {}]
  %s7 = inlined_call_operand.vmem [shape: f32[1,128], index: 7, kind: input, shape index: {}]
  %s8 = inlined_call_operand.hbm [shape: f32[16,128], index: 8, kind: output, shape index: {0}]
  %s9 = inlined_call_operand.vmem [shape: f32[16,1], index: 9, kind: output, shape index: {1}]
  %10 = xla_tuple %s8, %s9
  %s11 = sld [smem:[#allocation0]]
  $region73: #{tpu_custom_call.1} parent=0
    _
  %s13 = ssub.s32 1, %s11
  %s14 = scalar_select 0, %s13, %s11
  $region1: #{tpu_custom_call.1} parent=0
    #allocation2 [shape = 'u8[8192]{0}', space=vmem, size = 0x2000, scoped, tag = 'output window, operand 0']
    #allocation3 [shape = 's32[2]{0}', space=sflag, size = 0x8, scoped, tag = 'scoped memory for tpu_custom_call.1']
    %15 = vsyncpa [#allocation3], 0
    %s16 = scalar_lea.sflag [#allocation3], 1
    %17 = vsyncpa %s16, 0
    loop: start=0, step=1, limit=4
    $region2: #{tpu_custom_call.1} parent=1 // loop_pre_header
      _
    $region3: #{tpu_custom_call.1} parent=1 // loop_header
      %s19 = sphi 0, %s23
      %p20 = scmp.ge.s32.totalorder %s19, 4
      %s29 = sphi 0, %s31
      %s32 = sphi 0, %s29
      %s33 = sphi 0, %s32
      %s49 = sphi 0, %s33
      %s53 = sphi 0, %s53
      %s55 = sphi 0, %s53
      %s56 = sphi 0, %s55
      %s70 = sphi 0, %s56
      %s74 = sphi 0, %s74
      %s76 = sphi 0, %s74
      %s77 = sphi 0, %s76
      %s91 = sphi 0, %s77
      %s95 = sphi 0, %s95
      %s97 = sphi 0, %s95
      %s98 = sphi 0, %s97
      %s112 = sphi 0, %s98
      %s116 = sphi 0, %s116
      %s118 = sphi 0, %s116
      %s119 = sphi 0, %s118
      %s133 = sphi 0, %s119
      %s137 = sphi 0, %s137
      %s139 = sphi 0, %s137
      %s140 = sphi 0, %s139
      %s154 = sphi 0, %s140
      %s158 = sphi 0, %s158
      %s160 = sphi 0, %s158
      %s161 = sphi 0, %s160
      %s175 = sphi 0, %s161
      %s179 = sphi 0, %s179
      %s181 = sphi 0, %s179
      %s182 = sphi 0, %s181
      %s196 = sphi 0, %s182
      %s202 = sphi 0, %s204
      %s205 = sphi 0, %s202
      %s206 = sphi 0, %s205
      %s222 = sphi 0, %s206
      %s228 = sphi 0, %s230
      %s231 = sphi 0, %s228
      %s232 = sphi 0, %s231
      %s248 = sphi 0, %s232
    $region4: #{tpu_custom_call.1} parent=1 // loop_header_branch
      %22 = sbr.rel (%p20) target = $region8
    $region5: #{tpu_custom_call.1} parent=1 // loop_body
      %s24 = ssub.s32 %s19, 1
      %s25 = ssub.s32 %s19, 2
      %s26 = sadd.s32 %s19, 1
      %s27 = ssub.s32 %s19, %s26
      %p28 = scmp.eq.s32.totalorder %s27, 0
      %s30 = sadd.s32 %s29, 1
      %s31 = scalar_select %p28, %s29, %s30
      %p34 = pneg %p28
      %p35 = scmp.eq.s32.totalorder %s19, 1
      %p36 = por %p34, %p35
      %p37 = scmp.ne.s32.totalorder %s29, %s32
      %p38 = scmp.eq.s32.totalorder %s19, 0
      %p39 = por %p37, %p38
      %p40 = scmp.ne.s32.totalorder %s29, %s32
      %p41 = scmp.eq.s32.totalorder %s24, 1
      %p42 = por %p40, %p41
      %p43 = scmp.ne.s32.totalorder %s32, %s33
      %p44 = scmp.eq.s32.totalorder %s24, 0
      %p45 = por %p43, %p44
      %p46 = scmp.ne.s32.totalorder %s32, %s33
      %p47 = scmp.eq.s32.totalorder %s25, 1
      %p48 = por %p46, %p47
      %p50 = scmp.ne.s32.totalorder %s33, %s49
      %p51 = scmp.eq.s32.totalorder %s25, 0
      %p52 = por %p50, %p51
      %s54 = sadd.s32 %s53, 1
      %p57 = scmp.eq.s32.totalorder %s19, 1
      %p58 = scmp.ne.s32.totalorder %s53, %s55
      %p59 = scmp.eq.s32.totalorder %s19, 0
      %p60 = por %p58, %p59
      %p61 = scmp.ne.s32.totalorder %s53, %s55
      %p62 = scmp.eq.s32.totalorder %s24, 1
      %p63 = por %p61, %p62
      %p64 = scmp.ne.s32.totalorder %s55, %s56
      %p65 = scmp.eq.s32.totalorder %s24, 0
      %p66 = por %p64, %p65
      %p67 = scmp.ne.s32.totalorder %s55, %s56
      %p68 = scmp.eq.s32.totalorder %s25, 1
      %p69 = por %p67, %p68
      %p71 = scmp.ne.s32.totalorder %s56, %s70
      %p72 = scmp.eq.s32.totalorder %s25, 0
      %p73 = por %p71, %p72
      %s75 = sadd.s32 %s74, 1
      %p78 = scmp.eq.s32.totalorder %s19, 1
      %p79 = scmp.ne.s32.totalorder %s74, %s76
      %p80 = scmp.eq.s32.totalorder %s19, 0
      %p81 = por %p79, %p80
      %p82 = scmp.ne.s32.totalorder %s74, %s76
      %p83 = scmp.eq.s32.totalorder %s24, 1
      %p84 = por %p82, %p83
      %p85 = scmp.ne.s32.totalorder %s76, %s77
      %p86 = scmp.eq.s32.totalorder %s24, 0
      %p87 = por %p85, %p86
      %p88 = scmp.ne.s32.totalorder %s76, %s77
      %p89 = scmp.eq.s32.totalorder %s25, 1
      %p90 = por %p88, %p89
      %p92 = scmp.ne.s32.totalorder %s77, %s91
      %p93 = scmp.eq.s32.totalorder %s25, 0
      %p94 = por %p92, %p93
      %s96 = sadd.s32 %s95, 1
      %p99 = scmp.eq.s32.totalorder %s19, 1
      %p100 = scmp.ne.s32.totalorder %s95, %s97
      %p101 = scmp.eq.s32.totalorder %s19, 0
      %p102 = por %p100, %p101
      %p103 = scmp.ne.s32.totalorder %s95, %s97
      %p104 = scmp.eq.s32.totalorder %s24, 1
      %p105 = por %p103, %p104
      %p106 = scmp.ne.s32.totalorder %s97, %s98
      %p107 = scmp.eq.s32.totalorder %s24, 0
      %p108 = por %p106, %p107
      %p109 = scmp.ne.s32.totalorder %s97, %s98
      %p110 = scmp.eq.s32.totalorder %s25, 1
      %p111 = por %p109, %p110
      %p113 = scmp.ne.s32.totalorder %s98, %s112
      %p114 = scmp.eq.s32.totalorder %s25, 0
      %p115 = por %p113, %p114
      %s117 = sadd.s32 %s116, 1
      %p120 = scmp.eq.s32.totalorder %s19, 1
      %p121 = scmp.ne.s32.totalorder %s116, %s118
      %p122 = scmp.eq.s32.totalorder %s19, 0
      %p123 = por %p121, %p122
      %p124 = scmp.ne.s32.totalorder %s116, %s118
      %p125 = scmp.eq.s32.totalorder %s24, 1
      %p126 = por %p124, %p125
      %p127 = scmp.ne.s32.totalorder %s118, %s119
      %p128 = scmp.eq.s32.totalorder %s24, 0
      %p129 = por %p127, %p128
      %p130 = scmp.ne.s32.totalorder %s118, %s119
      %p131 = scmp.eq.s32.totalorder %s25, 1
      %p132 = por %p130, %p131
      %p134 = scmp.ne.s32.totalorder %s119, %s133
      %p135 = scmp.eq.s32.totalorder %s25, 0
      %p136 = por %p134, %p135
      %s138 = sadd.s32 %s137, 1
      %p141 = scmp.eq.s32.totalorder %s19, 1
      %p142 = scmp.ne.s32.totalorder %s137, %s139
      %p143 = scmp.eq.s32.totalorder %s19, 0
      %p144 = por %p142, %p143
      %p145 = scmp.ne.s32.totalorder %s137, %s139
      %p146 = scmp.eq.s32.totalorder %s24, 1
      %p147 = por %p145, %p146
      %p148 = scmp.ne.s32.totalorder %s139, %s140
      %p149 = scmp.eq.s32.totalorder %s24, 0
      %p150 = por %p148, %p149
      %p151 = scmp.ne.s32.totalorder %s139, %s140
      %p152 = scmp.eq.s32.totalorder %s25, 1
      %p153 = por %p151, %p152
      %p155 = scmp.ne.s32.totalorder %s140, %s154
      %p156 = scmp.eq.s32.totalorder %s25, 0
      %p157 = por %p155, %p156
      %s159 = sadd.s32 %s158, 1
      %p162 = scmp.eq.s32.totalorder %s19, 1
      %p163 = scmp.ne.s32.totalorder %s158, %s160
      %p164 = scmp.eq.s32.totalorder %s19, 0
      %p165 = por %p163, %p164
      %p166 = scmp.ne.s32.totalorder %s158, %s160
      %p167 = scmp.eq.s32.totalorder %s24, 1
      %p168 = por %p166, %p167
      %p169 = scmp.ne.s32.totalorder %s160, %s161
      %p170 = scmp.eq.s32.totalorder %s24, 0
      %p171 = por %p169, %p170
      %p172 = scmp.ne.s32.totalorder %s160, %s161
      %p173 = scmp.eq.s32.totalorder %s25, 1
      %p174 = por %p172, %p173
      %p176 = scmp.ne.s32.totalorder %s161, %s175
      %p177 = scmp.eq.s32.totalorder %s25, 0
      %p178 = por %p176, %p177
      %s180 = sadd.s32 %s179, 1
      %p183 = scmp.eq.s32.totalorder %s19, 1
      %p184 = scmp.ne.s32.totalorder %s179, %s181
      %p185 = scmp.eq.s32.totalorder %s19, 0
      %p186 = por %p184, %p185
      %p187 = scmp.ne.s32.totalorder %s179, %s181
      %p188 = scmp.eq.s32.totalorder %s24, 1
      %p189 = por %p187, %p188
      %p190 = scmp.ne.s32.totalorder %s181, %s182
      %p191 = scmp.eq.s32.totalorder %s24, 0
      %p192 = por %p190, %p191
      %p193 = scmp.ne.s32.totalorder %s181, %s182
      %p194 = scmp.eq.s32.totalorder %s25, 1
      %p195 = por %p193, %p194
      %p197 = scmp.ne.s32.totalorder %s182, %s196
      %p198 = scmp.eq.s32.totalorder %s25, 0
      %p199 = por %p197, %p198
      %s200 = ssub.s32 %s19, %s26
      %p201 = scmp.eq.s32.totalorder %s200, 0
      %s203 = sadd.s32 %s202, 1
      %s204 = scalar_select %p201, %s202, %s203
      %p207 = pneg %p201
      %p208 = scmp.eq.s32.totalorder %s19, 1
      %p209 = por %p207, %p208
      %p210 = scmp.ne.s32.totalorder %s202, %s205
      %p211 = scmp.eq.s32.totalorder %s19, 0
      %p212 = por %p210, %p211
      %p213 = scmp.ne.s32.totalorder %s202, %s205
      %p214 = scmp.eq.s32.totalorder %s24, 1
      %p215 = por %p213, %p214
      %p216 = scmp.ne.s32.totalorder %s205, %s206
      %p217 = scmp.eq.s32.totalorder %s24, 0
      %p218 = por %p216, %p217
      %p219 = scmp.ne.s32.totalorder %s205, %s206
      %p220 = scmp.eq.s32.totalorder %s25, 1
      %p221 = por %p219, %p220
      %p223 = scmp.ne.s32.totalorder %s206, %s222
      %p224 = scmp.eq.s32.totalorder %s25, 0
      %p225 = por %p223, %p224
      %s226 = ssub.s32 %s19, %s26
      %p227 = scmp.eq.s32.totalorder %s226, 0
      %s229 = sadd.s32 %s228, 1
      %s230 = scalar_select %p227, %s228, %s229
      %p233 = pneg %p227
      %p234 = scmp.eq.s32.totalorder %s19, 1
      %p235 = por %p233, %p234
      %p236 = scmp.ne.s32.totalorder %s228, %s231
      %p237 = scmp.eq.s32.totalorder %s19, 0
      %p238 = por %p236, %p237
      %p239 = scmp.ne.s32.totalorder %s228, %s231
      %p240 = scmp.eq.s32.totalorder %s24, 1
      %p241 = por %p239, %p240
      %p242 = scmp.ne.s32.totalorder %s231, %s232
      %p243 = scmp.eq.s32.totalorder %s24, 0
      %p244 = por %p242, %p243
      %p245 = scmp.ne.s32.totalorder %s231, %s232
      %p246 = scmp.eq.s32.totalorder %s25, 1
      %p247 = por %p245, %p246
      %p249 = scmp.ne.s32.totalorder %s232, %s248
      %p250 = scmp.eq.s32.totalorder %s25, 0
      %p251 = por %p249, %p250
      %p252 = scmp.le.s32.totalorder 1, %s19
      %p253 = scmp.lt.s32.totalorder %s19, 3
      %p254 = pnand %p252, %p253
      %p255 = pneg %p254
      // Predicated region
      $region9: #{tpu_custom_call.1} parent=5 // pred_check
        _
      $region10: #{tpu_custom_call.1} parent=5 // pred_check_branch
        %257 = sbr.rel (%p254) target = $region12
      $region11: #{tpu_custom_call.1} parent=5 // pred_region
        %s258 = ssub.s32 %s19, 1
        // Predicated region
        $region13: #{tpu_custom_call.1} parent=11 // pred_check
          %p259 = pneg %p66
        $region14: #{tpu_custom_call.1} parent=11 // pred_check_branch
          %261 = sbr.rel (%p259) target = $region16
        $region15: #{tpu_custom_call.1} parent=11 // pred_region
          _
        $region16: #{tpu_custom_call.1} parent=11 // pred_fallthru
          _
        // Predicated region
        $region17: #{tpu_custom_call.1} parent=11 // pred_check
          %p262 = pneg %p87
        $region18: #{tpu_custom_call.1} parent=11 // pred_check_branch
          %264 = sbr.rel (%p262) target = $region20
        $region19: #{tpu_custom_call.1} parent=11 // pred_region
          _
        $region20: #{tpu_custom_call.1} parent=11 // pred_fallthru
          _
        // Predicated region
        $region21: #{tpu_custom_call.1} parent=11 // pred_check
          %p265 = pneg %p108
        $region22: #{tpu_custom_call.1} parent=11 // pred_check_branch
          %267 = sbr.rel (%p265) target = $region24
        $region23: #{tpu_custom_call.1} parent=11 // pred_region
          _
        $region24: #{tpu_custom_call.1} parent=11 // pred_fallthru
          _
        // Predicated region
        $region25: #{tpu_custom_call.1} parent=11 // pred_check
          %p268 = pneg %p129
        $region26: #{tpu_custom_call.1} parent=11 // pred_check_branch
          %270 = sbr.rel (%p268) target = $region28
        $region27: #{tpu_custom_call.1} parent=11 // pred_region
          _
        $region28: #{tpu_custom_call.1} parent=11 // pred_fallthru
          _
        // Predicated region
        $region29: #{tpu_custom_call.1} parent=11 // pred_check
          %p271 = pneg %p150
        $region30: #{tpu_custom_call.1} parent=11 // pred_check_branch
          %273 = sbr.rel (%p271) target = $region32
        $region31: #{tpu_custom_call.1} parent=11 // pred_region
          _
        $region32: #{tpu_custom_call.1} parent=11 // pred_fallthru
          _
        // Predicated region
        $region33: #{tpu_custom_call.1} parent=11 // pred_check
          %p274 = pneg %p171
        $region34: #{tpu_custom_call.1} parent=11 // pred_check_branch
          %276 = sbr.rel (%p274) target = $region36
        $region35: #{tpu_custom_call.1} parent=11 // pred_region
          _
        $region36: #{tpu_custom_call.1} parent=11 // pred_fallthru
          _
        // Predicated region
        $region37: #{tpu_custom_call.1} parent=11 // pred_check
          %p277 = pneg %p192
        $region38: #{tpu_custom_call.1} parent=11 // pred_check_branch
          %279 = sbr.rel (%p277) target = $region40
        $region39: #{tpu_custom_call.1} parent=11 // pred_region
          _
        $region40: #{tpu_custom_call.1} parent=11 // pred_fallthru
          _
      $region12: #{tpu_custom_call.1} parent=5 // pred_fallthru
        _
      %p280 = scmp.lt.s32.totalorder %s19, 2
      // Predicated region
      $region41: #{tpu_custom_call.1} parent=5 // pred_check
        %p281 = pneg %p280
      $region42: #{tpu_custom_call.1} parent=5 // pred_check_branch
        %283 = sbr.rel (%p281) target = $region44
      $region43: #{tpu_custom_call.1} parent=5 // pred_region
        // Predicated region
        $region45: #{tpu_custom_call.1} parent=43 // pred_check
          %p284 = pneg %p39
        $region46: #{tpu_custom_call.1} parent=43 // pred_check_branch
          %286 = sbr.rel (%p284) target = $region48
        $region47: #{tpu_custom_call.1} parent=43 // pred_region
          %p287 = scmp.lt.s32.totalorder %s19, 1
          %s288 = scalar_select %p287, %s19, 1
          %s289 = smul.addr %s288, 8
          %s290 = scalar_lea.vmem %s0, %s289
        $region48: #{tpu_custom_call.1} parent=43 // pred_fallthru
          _
      $region44: #{tpu_custom_call.1} parent=5 // pred_fallthru
        _
      %p291 = scmp.le.s32.totalorder 1, %s19
      %p292 = scmp.lt.s32.totalorder %s19, 3
      %p293 = pnand %p291, %p292
      %p294 = pneg %p293
      // Predicated region
      $region49: #{tpu_custom_call.1} parent=5 // pred_check
        _
      $region50: #{tpu_custom_call.1} parent=5 // pred_check_branch
        %296 = sbr.rel (%p293) target = $region52
      $region51: #{tpu_custom_call.1} parent=5 // pred_region
        %s297 = ssub.s32 %s19, 1
        %p298 = scmp.lt.s32.totalorder %s24, 1
        %s299 = scalar_select %p298, %s24, 1
        %s300 = smul.addr %s299, 8
        %s301 = scalar_lea.vmem %s0, %s300
        %p302 = pneg %p45
        %p303 = pneg %p42
        %p304 = pneg %p66
        %p305 = pneg %p63
        %p306 = pneg %p87
        %p307 = pneg %p84
        %p308 = pneg %p108
        %p309 = pneg %p105
        %p310 = pneg %p129
        %p311 = pneg %p126
        %p312 = pneg %p150
        %p313 = pneg %p147
        %p314 = pneg %p171
        %p315 = pneg %p168
        %p316 = pneg %p192
        %p317 = pneg %p189
        %p318 = pneg %p218
        %p319 = pneg %p215
        %s320 = sand.u32 %s205, 1
        %s321 = scalar_lea.sflag [#allocation3], %s320
        %s322 = sand.u32 %s205, 1
        %s323 = smul.addr %s322, 8
        %s324 = scalar_lea.vmem [#allocation2], %s323
        %p325 = pneg %p244
        %p326 = pneg %p241
        %p327 = scmp.lt.s32.totalorder %s24, 1
        %s328 = scalar_select %p327, %s24, 1
        %s329 = smul.addr %s328, 8
        %s330 = scalar_lea.vmem %s9, %s329
        %p331 = scmp.lt.s32.totalorder %s24, 1
        %s332 = scalar_select %p331, %s24, 1
        %s333 = smul.addr %s332, 8
        %s334 = scalar_lea.vmem %s0, %s333
        %p335 = scmp.lt.s32.totalorder %s24, 1
        %s336 = scalar_select %p335, %s24, 1
        %s337 = smul.addr %s336, 8
        %s338 = scalar_lea.vmem %s9, %s337
        %v339 = vld [vmem:[%s334] sm:$0xff]
        %vm340 = vcmask 261120
        %v341 = vsel %vm340, %v339, 0.0
        %342 = vadd.xlane.f32.xlu0 %v341
        %v343 = vpop.xlane.xlu0 %342
        %v344 = vrcp.pop 32.0
        %v345 = vmul.f32 %v343, %v344
        %v346 = vsub.f32 %v339, %v345
        %v347 = vmul.f32 %v346, %v346
        %v348 = vsel %vm340, %v347, 0.0
        %349 = vadd.xlane.f32.xlu0 %v348
        %v350 = vpop.xlane.xlu0 %349
        %v351 = vmul.f32 %v350, %v344
        %v352 = vadd.f32 %v351, 1e-05
        %v353 = vrsqrt.pop %v352
        %v354 = vmul.f32 %v346, %v353
        %v355 = vld [vmem:[%s1] sm:$0xff]
        %v356 = vld [vmem:[%s1 + $0x8] sm:$0xff]
        %v357 = vld [vmem:[%s1 + $0x10] sm:$0xff]
        %v358 = vld [vmem:[%s1 + $0x18] sm:$0xff]
        %v359 = vld [vmem:[%s2] sm:$0x1]
        %v361 = vlaneseq
        %v362 = vshrl.u32 %v361, 7
        %v363 = vsub.s32 0, %v362
        %v364 = vrot.slane %v359, %v363
        %v367 = vsel %vm340, %v354, 0
        %369 = vmatprep.subr.mxu0 0.0
        %v370 = vand.u32 %v355, 4294901760
        %371 = vmatpush1.msra.mxu0 %v370
        %372 = vmatprep.subr.mxu0 0.0
        %v373 = vand.u32 %v356, 4294901760
        %374 = vmatpush1.msra.mxu0 %v373
        %375 = vmatprep.subr.mxu0 0.0
        %v376 = vand.u32 %v357, 4294901760
        %377 = vmatpush1.msra.mxu0 %v376
        %378 = vmatprep.subr.mxu0 0.0
        %v379 = vand.u32 %v358, 4294901760
        %380 = vmatpush1.msra.mxu0 %v379
        %381 = vmatprep.subr.mxu0 0.0
        %382 = vmatpush1.msra.mxu0 0.0
        %383 = vmatprep.subr.mxu0 0.0
        %384 = vmatpush1.msra.mxu0 0.0
        %385 = vmatprep.subr.mxu0 0.0
        %386 = vmatpush1.msra.mxu0 0.0
        %387 = vmatprep.subr.mxu0 0.0
        %388 = vmatpush1.msra.mxu0 0.0
        %389 = vmatprep.subr.mxu0 0.0
        %390 = vmatpush1.msra.mxu0 0.0
        %391 = vmatprep.subr.mxu0 0.0
        %392 = vmatpush1.msra.mxu0 0.0
        %393 = vmatprep.subr.mxu0 0.0
        %394 = vmatpush1.msra.mxu0 0.0
        %395 = vmatprep.subr.mxu0 0.0
        %396 = vmatpush1.msra.mxu0 0.0
        %397 = vmatprep.subr.mxu0 0.0
        %398 = vmatpush1.msra.mxu0 0.0
        %399 = vmatprep.subr.mxu0 0.0
        %400 = vmatpush1.msra.mxu0 0.0
        %401 = vmatprep.subr.mxu0 0.0
        %402 = vmatpush1.msra.mxu0 0.0
        %403 = vmatprep.subr.mxu0 0.0
        %404 = vmatpush1.msra.mxu0 0.0
        %405 = vmatprep.subr.mxu0 0.0
        %406 = vmatpush1.msra.mxu0 0.0
        %407 = vmatprep.subr.mxu0 0.0
        %408 = vmatpush1.msra.mxu0 0.0
        %409 = vmatprep.subr.mxu0 0.0
        %410 = vmatpush1.msra.mxu0 0.0
        %411 = vmatprep.subr.mxu0 0.0
        %412 = vmatpush1.msra.mxu0 0.0
        %413 = vmatprep.subr.mxu0 0.0
        %414 = vmatpush1.msra.mxu0 0.0
        %415 = vmatprep.subr.mxu0 0.0
        %416 = vmatpush1.msra.mxu0 0.0
        %417 = vmatprep.subr.mxu0 0.0
        %418 = vmatpush1.msra.mxu0 0.0
        %419 = vmatprep.subr.mxu0 0.0
        %420 = vmatpush1.msra.mxu0 0.0
        %421 = vmatprep.subr.mxu0 0.0
        %422 = vmatpush1.msra.mxu0 0.0
        %423 = vmatprep.subr.mxu0 0.0
        %424 = vmatpush1.msra.mxu0 0.0
        %425 = vmatprep.subr.mxu0 0.0
        %426 = vmatpush1.msra.mxu0 0.0
        %427 = vmatprep.subr.mxu0 0.0
        %428 = vmatpush1.msra.mxu0 0.0
        %429 = vmatprep.subr.mxu0 0.0
        %430 = vmatpush1.msra.mxu0 0.0
        %431 = vmatprep.subr.mxu0 0.0
        %432 = vmatpush1.msra.mxu0 0.0
        %433 = vmatprep.subr.mxu0 0.0
        %434 = vmatpush1.msra.mxu0 0.0
        %435 = vmatprep.subr.mxu0 0.0
        %436 = vmatpush1.msra.mxu0 0.0
        %437 = vmatprep.mubr.f32.mxu0 0.0
        %v438 = vand.u32 %v367, 4294901760
        %v439 = vsub.f32 %v367, %v438
        %v440 = vand.u32 %v439, 4294901760
        %v441 = vsub.f32 %v439, %v440
        %v442 = vand.u32 %v441, 4294901760
        %443 = vmatmul.mubr.f32.gmra.mrb[0].mxu0 %v442
        %v444 = vpop.f32.mrb[0].mxu0
        %v445 = vadd.f32 %v364, %v444
        %v446 = vpop.f32.mrb[0].mxu0
        %447 = vdwg.mxu0
        %448 = vmatprep.subr.mxu0 0.0
        %v449 = vand.u32 %v355, 4294901760
        %v450 = vsub.f32 %v355, %v449
        %v451 = vand.u32 %v450, 4294901760
        %v452 = vsub.f32 %v450, %v451
        %v453 = vand.u32 %v452, 4294901760
        %454 = vmatpush1.msra.mxu0 %v453
        %455 = vmatprep.subr.mxu0 0.0
        %v456 = vand.u32 %v356, 4294901760
        %v457 = vsub.f32 %v356, %v456
        %v458 = vand.u32 %v457, 4294901760
        %v459 = vsub.f32 %v457, %v458
        %v460 = vand.u32 %v459, 4294901760
        %461 = vmatpush1.msra.mxu0 %v460
        %462 = vmatprep.subr.mxu0 0.0
        %v463 = vand.u32 %v357, 4294901760
        %v464 = vsub.f32 %v357, %v463
        %v465 = vand.u32 %v464, 4294901760
        %v466 = vsub.f32 %v464, %v465
        %v467 = vand.u32 %v466, 4294901760
        %468 = vmatpush1.msra.mxu0 %v467
        %469 = vmatprep.subr.mxu0 0.0
        %v470 = vand.u32 %v358, 4294901760
        %v471 = vsub.f32 %v358, %v470
        %v472 = vand.u32 %v471, 4294901760
        %v473 = vsub.f32 %v471, %v472
        %v474 = vand.u32 %v473, 4294901760
        %475 = vmatpush1.msra.mxu0 %v474
        %476 = vmatprep.subr.mxu0 0.0
        %477 = vmatpush1.msra.mxu0 0.0
        %478 = vmatprep.subr.mxu0 0.0
        %479 = vmatpush1.msra.mxu0 0.0
        %480 = vmatprep.subr.mxu0 0.0
        %481 = vmatpush1.msra.mxu0 0.0
        %482 = vmatprep.subr.mxu0 0.0
        %483 = vmatpush1.msra.mxu0 0.0
        %484 = vmatprep.subr.mxu0 0.0
        %485 = vmatpush1.msra.mxu0 0.0
        %486 = vmatprep.subr.mxu0 0.0
        %487 = vmatpush1.msra.mxu0 0.0
        %488 = vmatprep.subr.mxu0 0.0
        %489 = vmatpush1.msra.mxu0 0.0
        %490 = vmatprep.subr.mxu0 0.0
        %491 = vmatpush1.msra.mxu0 0.0
        %492 = vmatprep.subr.mxu0 0.0
        %493 = vmatpush1.msra.mxu0 0.0
        %494 = vmatprep.subr.mxu0 0.0
        %495 = vmatpush1.msra.mxu0 0.0
        %496 = vmatprep.subr.mxu0 0.0
        %497 = vmatpush1.msra.mxu0 0.0
        %498 = vmatprep.subr.mxu0 0.0
        %499 = vmatpush1.msra.mxu0 0.0
        %500 = vmatprep.subr.mxu0 0.0
        %501 = vmatpush1.msra.mxu0 0.0
        %502 = vmatprep.subr.mxu0 0.0
        %503 = vmatpush1.msra.mxu0 0.0
        %504 = vmatprep.subr.mxu0 0.0
        %505 = vmatpush1.msra.mxu0 0.0
        %506 = vmatprep.subr.mxu0 0.0
        %507 = vmatpush1.msra.mxu0 0.0
        %508 = vmatprep.subr.mxu0 0.0
        %509 = vmatpush1.msra.mxu0 0.0
        %510 = vmatprep.subr.mxu0 0.0
        %511 = vmatpush1.msra.mxu0 0.0
        %512 = vmatprep.subr.mxu0 0.0
        %513 = vmatpush1.msra.mxu0 0.0
        %514 = vmatprep.subr.mxu0 0.0
        %515 = vmatpush1.msra.mxu0 0.0
        %516 = vmatprep.subr.mxu0 0.0
        %517 = vmatpush1.msra.mxu0 0.0
        %518 = vmatprep.subr.mxu0 0.0
        %519 = vmatpush1.msra.mxu0 0.0
        %520 = vmatprep.subr.mxu0 0.0
        %521 = vmatpush1.msra.mxu0 0.0
        %522 = vmatprep.subr.mxu0 0.0
        %523 = vmatpush1.msra.mxu0 0.0
        %524 = vmatprep.subr.mxu0 0.0
        %525 = vmatpush1.msra.mxu0 0.0
        %526 = vmatprep.subr.mxu0 0.0
        %527 = vmatpush1.msra.mxu0 0.0
        %528 = vmatprep.subr.mxu0 0.0
        %529 = vmatpush1.msra.mxu0 0.0
        %530 = vmatprep.subr.mxu0 0.0
        %531 = vmatpush1.msra.mxu0 0.0
        %532 = vmatprep.mubr.f32.mxu0 0.0
        %v533 = vand.u32 %v367, 4294901760
        %534 = vmatmul.mubr.f32.gmra.mrb[0].mxu0 %v533
        %v535 = vpop.f32.mrb[0].mxu0
        %v536 = vadd.f32 %v445, %v535
        %v537 = vpop.f32.mrb[0].mxu0
        %538 = vdwg.mxu0
        %539 = vmatprep.subr.mxu0 0.0
        %v540 = vand.u32 %v355, 4294901760
        %v541 = vsub.f32 %v355, %v540
        %542 = vmatpush1.msra.mxu0 %v541
        %543 = vmatprep.subr.mxu0 0.0
        %v544 = vand.u32 %v356, 4294901760
        %v545 = vsub.f32 %v356, %v544
        %546 = vmatpush1.msra.mxu0 %v545
        %547 = vmatprep.subr.mxu0 0.0
        %v548 = vand.u32 %v357, 4294901760
        %v549 = vsub.f32 %v357, %v548
        %550 = vmatpush1.msra.mxu0 %v549
        %551 = vmatprep.subr.mxu0 0.0
        %v552 = vand.u32 %v358, 4294901760
        %v553 = vsub.f32 %v358, %v552
        %554 = vmatpush1.msra.mxu0 %v553
        %555 = vmatprep.subr.mxu0 0.0
        %556 = vmatpush1.msra.mxu0 0.0
        %557 = vmatprep.subr.mxu0 0.0
        %558 = vmatpush1.msra.mxu0 0.0
        %559 = vmatprep.subr.mxu0 0.0
        %560 = vmatpush1.msra.mxu0 0.0
        %561 = vmatprep.subr.mxu0 0.0
        %562 = vmatpush1.msra.mxu0 0.0
        %563 = vmatprep.subr.mxu0 0.0
        %564 = vmatpush1.msra.mxu0 0.0
        %565 = vmatprep.subr.mxu0 0.0
        %566 = vmatpush1.msra.mxu0 0.0
        %567 = vmatprep.subr.mxu0 0.0
        %568 = vmatpush1.msra.mxu0 0.0
        %569 = vmatprep.subr.mxu0 0.0
        %570 = vmatpush1.msra.mxu0 0.0
        %571 = vmatprep.subr.mxu0 0.0
        %572 = vmatpush1.msra.mxu0 0.0
        %573 = vmatprep.subr.mxu0 0.0
        %574 = vmatpush1.msra.mxu0 0.0
        %575 = vmatprep.subr.mxu0 0.0
        %576 = vmatpush1.msra.mxu0 0.0
        %577 = vmatprep.subr.mxu0 0.0
        %578 = vmatpush1.msra.mxu0 0.0
        %579 = vmatprep.subr.mxu0 0.0
        %580 = vmatpush1.msra.mxu0 0.0
        %581 = vmatprep.subr.mxu0 0.0
        %582 = vmatpush1.msra.mxu0 0.0
        %583 = vmatprep.subr.mxu0 0.0
        %584 = vmatpush1.msra.mxu0 0.0
        %585 = vmatprep.subr.mxu0 0.0
        %586 = vmatpush1.msra.mxu0 0.0
        %587 = vmatprep.subr.mxu0 0.0
        %588 = vmatpush1.msra.mxu0 0.0
        %589 = vmatprep.subr.mxu0 0.0
        %590 = vmatpush1.msra.mxu0 0.0
        %591 = vmatprep.subr.mxu0 0.0
        %592 = vmatpush1.msra.mxu0 0.0
        %593 = vmatprep.subr.mxu0 0.0
        %594 = vmatpush1.msra.mxu0 0.0
        %595 = vmatprep.subr.mxu0 0.0
        %596 = vmatpush1.msra.mxu0 0.0
        %597 = vmatprep.subr.mxu0 0.0
        %598 = vmatpush1.msra.mxu0 0.0
        %599 = vmatprep.subr.mxu0 0.0
        %600 = vmatpush1.msra.mxu0 0.0
        %601 = vmatprep.subr.mxu0 0.0
        %602 = vmatpush1.msra.mxu0 0.0
        %603 = vmatprep.subr.mxu0 0.0
        %604 = vmatpush1.msra.mxu0 0.0
        %605 = vmatprep.subr.mxu0 0.0
        %606 = vmatpush1.msra.mxu0 0.0
        %607 = vmatprep.subr.mxu0 0.0
        %608 = vmatpush1.msra.mxu0 0.0
        %609 = vmatprep.subr.mxu0 0.0
        %610 = vmatpush1.msra.mxu0 0.0
        %611 = vmatprep.mubr.f32.mxu0 0.0
        %v612 = vand.u32 %v367, 4294901760
        %v613 = vsub.f32 %v367, %v612
        %614 = vmatmul.mubr.f32.gmra.mrb[0].mxu0 %v613
        %v615 = vpop.f32.mrb[0].mxu0
        %v616 = vadd.f32 %v536, %v615
        %v617 = vpop.f32.mrb[0].mxu0
        %618 = vdwg.mxu0
        %619 = vmatprep.subr.mxu0 0.0
        %v620 = vand.u32 %v355, 4294901760
        %621 = vmatpush1.msra.mxu0 %v620
        %622 = vmatprep.subr.mxu0 0.0
        %v623 = vand.u32 %v356, 4294901760
        %624 = vmatpush1.msra.mxu0 %v623
        %625 = vmatprep.subr.mxu0 0.0
        %v626 = vand.u32 %v357, 4294901760
        %627 = vmatpush1.msra.mxu0 %v626
        %628 = vmatprep.subr.mxu0 0.0
        %v629 = vand.u32 %v358, 4294901760
        %630 = vmatpush1.msra.mxu0 %v629
        %631 = vmatprep.subr.mxu0 0.0
        %632 = vmatpush1.msra.mxu0 0.0
        %633 = vmatprep.subr.mxu0 0.0
        %634 = vmatpush1.msra.mxu0 0.0
        %635 = vmatprep.subr.mxu0 0.0
        %636 = vmatpush1.msra.mxu0 0.0
        %637 = vmatprep.subr.mxu0 0.0
        %638 = vmatpush1.msra.mxu0 0.0
        %639 = vmatprep.subr.mxu0 0.0
        %640 = vmatpush1.msra.mxu0 0.0
        %641 = vmatprep.subr.mxu0 0.0
        %642 = vmatpush1.msra.mxu0 0.0
        %643 = vmatprep.subr.mxu0 0.0
        %644 = vmatpush1.msra.mxu0 0.0
        %645 = vmatprep.subr.mxu0 0.0
        %646 = vmatpush1.msra.mxu0 0.0
        %647 = vmatprep.subr.mxu0 0.0
        %648 = vmatpush1.msra.mxu0 0.0
        %649 = vmatprep.subr.mxu0 0.0
        %650 = vmatpush1.msra.mxu0 0.0
        %651 = vmatprep.subr.mxu0 0.0
        %652 = vmatpush1.msra.mxu0 0.0
        %653 = vmatprep.subr.mxu0 0.0
        %654 = vmatpush1.msra.mxu0 0.0
        %655 = vmatprep.subr.mxu0 0.0
        %656 = vmatpush1.msra.mxu0 0.0
        %657 = vmatprep.subr.mxu0 0.0
        %658 = vmatpush1.msra.mxu0 0.0
        %659 = vmatprep.subr.mxu0 0.0
        %660 = vmatpush1.msra.mxu0 0.0
        %661 = vmatprep.subr.mxu0 0.0
        %662 = vmatpush1.msra.mxu0 0.0
        %663 = vmatprep.subr.mxu0 0.0
        %664 = vmatpush1.msra.mxu0 0.0
        %665 = vmatprep.subr.mxu0 0.0
        %666 = vmatpush1.msra.mxu0 0.0
        %667 = vmatprep.subr.mxu0 0.0
        %668 = vmatpush1.msra.mxu0 0.0
        %669 = vmatprep.subr.mxu0 0.0
        %670 = vmatpush1.msra.mxu0 0.0
        %671 = vmatprep.subr.mxu0 0.0
        %672 = vmatpush1.msra.mxu0 0.0
        %673 = vmatprep.subr.mxu0 0.0
        %674 = vmatpush1.msra.mxu0 0.0
        %675 = vmatprep.subr.mxu0 0.0
        %676 = vmatpush1.msra.mxu0 0.0
        %677 = vmatprep.subr.mxu0 0.0
        %678 = vmatpush1.msra.mxu0 0.0
        %679 = vmatprep.subr.mxu0 0.0
        %680 = vmatpush1.msra.mxu0 0.0
        %681 = vmatprep.subr.mxu0 0.0
        %682 = vmatpush1.msra.mxu0 0.0
        %683 = vmatprep.subr.mxu0 0.0
        %684 = vmatpush1.msra.mxu0 0.0
        %685 = vmatprep.subr.mxu0 0.0
        %686 = vmatpush1.msra.mxu0 0.0
        %687 = vmatprep.mubr.f32.mxu0 0.0
        %v688 = vand.u32 %v367, 4294901760
        %v689 = vsub.f32 %v367, %v688
        %v690 = vand.u32 %v689, 4294901760
        %691 = vmatmul.mubr.f32.gmra.mrb[0].mxu0 %v690
        %v692 = vpop.f32.mrb[0].mxu0
        %v693 = vadd.f32 %v616, %v692
        %v694 = vpop.f32.mrb[0].mxu0
        %695 = vdwg.mxu0
        %696 = vmatprep.subr.mxu0 0.0
        %v697 = vand.u32 %v355, 4294901760
        %v698 = vsub.f32 %v355, %v697
        %v699 = vand.u32 %v698, 4294901760
        %700 = vmatpush1.msra.mxu0 %v699
        %701 = vmatprep.subr.mxu0 0.0
        %v702 = vand.u32 %v356, 4294901760
        %v703 = vsub.f32 %v356, %v702
        %v704 = vand.u32 %v703, 4294901760
        %705 = vmatpush1.msra.mxu0 %v704
        %706 = vmatprep.subr.mxu0 0.0
        %v707 = vand.u32 %v357, 4294901760
        %v708 = vsub.f32 %v357, %v707
        %v709 = vand.u32 %v708, 4294901760
        %710 = vmatpush1.msra.mxu0 %v709
        %711 = vmatprep.subr.mxu0 0.0
        %v712 = vand.u32 %v358, 4294901760
        %v713 = vsub.f32 %v358, %v712
        %v714 = vand.u32 %v713, 4294901760
        %715 = vmatpush1.msra.mxu0 %v714
        %716 = vmatprep.subr.mxu0 0.0
        %717 = vmatpush1.msra.mxu0 0.0
        %718 = vmatprep.subr.mxu0 0.0
        %719 = vmatpush1.msra.mxu0 0.0
        %720 = vmatprep.subr.mxu0 0.0
        %721 = vmatpush1.msra.mxu0 0.0
        %722 = vmatprep.subr.mxu0 0.0
        %723 = vmatpush1.msra.mxu0 0.0
        %724 = vmatprep.subr.mxu0 0.0
        %725 = vmatpush1.msra.mxu0 0.0
        %726 = vmatprep.subr.mxu0 0.0
        %727 = vmatpush1.msra.mxu0 0.0
        %728 = vmatprep.subr.mxu0 0.0
        %729 = vmatpush1.msra.mxu0 0.0
        %730 = vmatprep.subr.mxu0 0.0
        %731 = vmatpush1.msra.mxu0 0.0
        %732 = vmatprep.subr.mxu0 0.0
        %733 = vmatpush1.msra.mxu0 0.0
        %734 = vmatprep.subr.mxu0 0.0
        %735 = vmatpush1.msra.mxu0 0.0
        %736 = vmatprep.subr.mxu0 0.0
        %737 = vmatpush1.msra.mxu0 0.0
        %738 = vmatprep.subr.mxu0 0.0
        %739 = vmatpush1.msra.mxu0 0.0
        %740 = vmatprep.subr.mxu0 0.0
        %741 = vmatpush1.msra.mxu0 0.0
        %742 = vmatprep.subr.mxu0 0.0
        %743 = vmatpush1.msra.mxu0 0.0
        %744 = vmatprep.subr.mxu0 0.0
        %745 = vmatpush1.msra.mxu0 0.0
        %746 = vmatprep.subr.mxu0 0.0
        %747 = vmatpush1.msra.mxu0 0.0
        %748 = vmatprep.subr.mxu0 0.0
        %749 = vmatpush1.msra.mxu0 0.0
        %750 = vmatprep.subr.mxu0 0.0
        %751 = vmatpush1.msra.mxu0 0.0
        %752 = vmatprep.subr.mxu0 0.0
        %753 = vmatpush1.msra.mxu0 0.0
        %754 = vmatprep.subr.mxu0 0.0
        %755 = vmatpush1.msra.mxu0 0.0
        %756 = vmatprep.subr.mxu0 0.0
        %757 = vmatpush1.msra.mxu0 0.0
        %758 = vmatprep.subr.mxu0 0.0
        %759 = vmatpush1.msra.mxu0 0.0
        %760 = vmatprep.subr.mxu0 0.0
        %761 = vmatpush1.msra.mxu0 0.0
        %762 = vmatprep.subr.mxu0 0.0
        %763 = vmatpush1.msra.mxu0 0.0
        %764 = vmatprep.subr.mxu0 0.0
        %765 = vmatpush1.msra.mxu0 0.0
        %766 = vmatprep.subr.mxu0 0.0
        %767 = vmatpush1.msra.mxu0 0.0
        %768 = vmatprep.subr.mxu0 0.0
        %769 = vmatpush1.msra.mxu0 0.0
        %770 = vmatprep.subr.mxu0 0.0
        %771 = vmatpush1.msra.mxu0 0.0
        %772 = vmatprep.mubr.f32.mxu0 0.0
        %v773 = vand.u32 %v367, 4294901760
        %774 = vmatmul.mubr.f32.gmra.mrb[0].mxu0 %v773
        %v775 = vpop.f32.mrb[0].mxu0
        %v776 = vadd.f32 %v693, %v775
        %v777 = vpop.f32.mrb[0].mxu0
        %778 = vdwg.mxu0
        %779 = vmatprep.subr.mxu0 0.0
        %v780 = vand.u32 %v355, 4294901760
        %781 = vmatpush1.msra.mxu0 %v780
        %782 = vmatprep.subr.mxu0 0.0
        %v783 = vand.u32 %v356, 4294901760
        %784 = vmatpush1.msra.mxu0 %v783
        %785 = vmatprep.subr.mxu0 0.0
        %v786 = vand.u32 %v357, 4294901760
        %787 = vmatpush1.msra.mxu0 %v786
        %788 = vmatprep.subr.mxu0 0.0
        %v789 = vand.u32 %v358, 4294901760
        %790 = vmatpush1.msra.mxu0 %v789
        %791 = vmatprep.subr.mxu0 0.0
        %792 = vmatpush1.msra.mxu0 0.0
        %793 = vmatprep.subr.mxu0 0.0
        %794 = vmatpush1.msra.mxu0 0.0
        %795 = vmatprep.subr.mxu0 0.0
        %796 = vmatpush1.msra.mxu0 0.0
        %797 = vmatprep.subr.mxu0 0.0
        %798 = vmatpush1.msra.mxu0 0.0
        %799 = vmatprep.subr.mxu0 0.0
        %800 = vmatpush1.msra.mxu0 0.0
        %801 = vmatprep.subr.mxu0 0.0
        %802 = vmatpush1.msra.mxu0 0.0
        %803 = vmatprep.subr.mxu0 0.0
        %804 = vmatpush1.msra.mxu0 0.0
        %805 = vmatprep.subr.mxu0 0.0
        %806 = vmatpush1.msra.mxu0 0.0
        %807 = vmatprep.subr.mxu0 0.0
        %808 = vmatpush1.msra.mxu0 0.0
        %809 = vmatprep.subr.mxu0 0.0
        %810 = vmatpush1.msra.mxu0 0.0
        %811 = vmatprep.subr.mxu0 0.0
        %812 = vmatpush1.msra.mxu0 0.0
        %813 = vmatprep.subr.mxu0 0.0
        %814 = vmatpush1.msra.mxu0 0.0
        %815 = vmatprep.subr.mxu0 0.0
        %816 = vmatpush1.msra.mxu0 0.0
        %817 = vmatprep.subr.mxu0 0.0
        %818 = vmatpush1.msra.mxu0 0.0
        %819 = vmatprep.subr.mxu0 0.0
        %820 = vmatpush1.msra.mxu0 0.0
        %821 = vmatprep.subr.mxu0 0.0
        %822 = vmatpush1.msra.mxu0 0.0
        %823 = vmatprep.subr.mxu0 0.0
        %824 = vmatpush1.msra.mxu0 0.0
        %825 = vmatprep.subr.mxu0 0.0
        %826 = vmatpush1.msra.mxu0 0.0
        %827 = vmatprep.subr.mxu0 0.0
        %828 = vmatpush1.msra.mxu0 0.0
        %829 = vmatprep.subr.mxu0 0.0
        %830 = vmatpush1.msra.mxu0 0.0
        %831 = vmatprep.subr.mxu0 0.0
        %832 = vmatpush1.msra.mxu0 0.0
        %833 = vmatprep.subr.mxu0 0.0
        %834 = vmatpush1.msra.mxu0 0.0
        %835 = vmatprep.subr.mxu0 0.0
        %836 = vmatpush1.msra.mxu0 0.0
        %837 = vmatprep.subr.mxu0 0.0
        %838 = vmatpush1.msra.mxu0 0.0
        %839 = vmatprep.subr.mxu0 0.0
        %840 = vmatpush1.msra.mxu0 0.0
        %841 = vmatprep.subr.mxu0 0.0
        %842 = vmatpush1.msra.mxu0 0.0
        %843 = vmatprep.subr.mxu0 0.0
        %844 = vmatpush1.msra.mxu0 0.0
        %845 = vmatprep.subr.mxu0 0.0
        %846 = vmatpush1.msra.mxu0 0.0
        %847 = vmatprep.mubr.f32.mxu0 0.0
        %v848 = vand.u32 %v367, 4294901760
        %849 = vmatmul.mubr.f32.gmra.mrb[0].mxu0 %v848
        %v850 = vpop.f32.mrb[0].mxu0
        %v851 = vadd.f32 %v776, %v850
        %v852 = vpop.f32.mrb[0].mxu0
        %853 = vdwg.mxu0
        %v854 = vmax.f32 %v851, 0.0
        %v855 = vld [vmem:[%s3] sm:$0xff]
        %v856 = vld [vmem:[%s3 + $0x8] sm:$0xff]
        %v857 = vld [vmem:[%s4] sm:$0x1]
        %v859 = vlaneseq
        %v860 = vshrl.u32 %v859, 7
        %v861 = vsub.s32 0, %v860
        %v862 = vrot.slane %v857, %v861
        %vm864 = vcmask 130048
        %v866 = vsel %vm864, %v854, 0
        %868 = vmatprep.subr.mxu0 0.0
        %v869 = vand.u32 %v855, 4294901760
        %870 = vmatpush1.msra.mxu0 %v869
        %871 = vmatprep.subr.mxu0 0.0
        %v872 = vand.u32 %v856, 4294901760
        %873 = vmatpush1.msra.mxu0 %v872
        %874 = vmatprep.subr.mxu0 0.0
        %875 = vmatpush1.msra.mxu0 0.0
        %876 = vmatprep.subr.mxu0 0.0
        %877 = vmatpush1.msra.mxu0 0.0
        %878 = vmatprep.subr.mxu0 0.0
        %879 = vmatpush1.msra.mxu0 0.0
        %880 = vmatprep.subr.mxu0 0.0
        %881 = vmatpush1.msra.mxu0 0.0
        %882 = vmatprep.subr.mxu0 0.0
        %883 = vmatpush1.msra.mxu0 0.0
        %884 = vmatprep.subr.mxu0 0.0
        %885 = vmatpush1.msra.mxu0 0.0
        %886 = vmatprep.subr.mxu0 0.0
        %887 = vmatpush1.msra.mxu0 0.0
        %888 = vmatprep.subr.mxu0 0.0
        %889 = vmatpush1.msra.mxu0 0.0
        %890 = vmatprep.subr.mxu0 0.0
        %891 = vmatpush1.msra.mxu0 0.0
        %892 = vmatprep.subr.mxu0 0.0
        %893 = vmatpush1.msra.mxu0 0.0
        %894 = vmatprep.subr.mxu0 0.0
        %895 = vmatpush1.msra.mxu0 0.0
        %896 = vmatprep.subr.mxu0 0.0
        %897 = vmatpush1.msra.mxu0 0.0
        %898 = vmatprep.subr.mxu0 0.0
        %899 = vmatpush1.msra.mxu0 0.0
        %900 = vmatprep.subr.mxu0 0.0
        %901 = vmatpush1.msra.mxu0 0.0
        %902 = vmatprep.subr.mxu0 0.0
        %903 = vmatpush1.msra.mxu0 0.0
        %904 = vmatprep.subr.mxu0 0.0
        %905 = vmatpush1.msra.mxu0 0.0
        %906 = vmatprep.subr.mxu0 0.0
        %907 = vmatpush1.msra.mxu0 0.0
        %908 = vmatprep.subr.mxu0 0.0
        %909 = vmatpush1.msra.mxu0 0.0
        %910 = vmatprep.subr.mxu0 0.0
        %911 = vmatpush1.msra.mxu0 0.0
        %912 = vmatprep.subr.mxu0 0.0
        %913 = vmatpush1.msra.mxu0 0.0
        %914 = vmatprep.subr.mxu0 0.0
        %915 = vmatpush1.msra.mxu0 0.0
        %916 = vmatprep.subr.mxu0 0.0
        %917 = vmatpush1.msra.mxu0 0.0
        %918 = vmatprep.subr.mxu0 0.0
        %919 = vmatpush1.msra.mxu0 0.0
        %920 = vmatprep.subr.mxu0 0.0
        %921 = vmatpush1.msra.mxu0 0.0
        %922 = vmatprep.subr.mxu0 0.0
        %923 = vmatpush1.msra.mxu0 0.0
        %924 = vmatprep.subr.mxu0 0.0
        %925 = vmatpush1.msra.mxu0 0.0
        %926 = vmatprep.subr.mxu0 0.0
        %927 = vmatpush1.msra.mxu0 0.0
        %928 = vmatprep.subr.mxu0 0.0
        %929 = vmatpush1.msra.mxu0 0.0
        %930 = vmatprep.subr.mxu0 0.0
        %931 = vmatpush1.msra.mxu0 0.0
        %932 = vmatprep.subr.mxu0 0.0
        %933 = vmatpush1.msra.mxu0 0.0
        %934 = vmatprep.mubr.f32.mxu0 0.0
        %v935 = vand.u32 %v866, 4294901760
        %v936 = vsub.f32 %v866, %v935
        %v937 = vand.u32 %v936, 4294901760
        %v938 = vsub.f32 %v936, %v937
        %v939 = vand.u32 %v938, 4294901760
        %940 = vmatmul.mubr.f32.gmra.mrb[0].mxu0 %v939
        %v941 = vpop.f32.mrb[0].mxu0
        %v942 = vadd.f32 %v862, %v941
        %v943 = vpop.f32.mrb[0].mxu0
        %944 = vdwg.mxu0
        %945 = vmatprep.subr.mxu0 0.0
        %v946 = vand.u32 %v855, 4294901760
        %v947 = vsub.f32 %v855, %v946
        %v948 = vand.u32 %v947, 4294901760
        %v949 = vsub.f32 %v947, %v948
        %v950 = vand.u32 %v949, 4294901760
        %951 = vmatpush1.msra.mxu0 %v950
        %952 = vmatprep.subr.mxu0 0.0
        %v953 = vand.u32 %v856, 4294901760
        %v954 = vsub.f32 %v856, %v953
        %v955 = vand.u32 %v954, 4294901760
        %v956 = vsub.f32 %v954, %v955
        %v957 = vand.u32 %v956, 4294901760
        %958 = vmatpush1.msra.mxu0 %v957
        %959 = vmatprep.subr.mxu0 0.0
        %960 = vmatpush1.msra.mxu0 0.0
        %961 = vmatprep.subr.mxu0 0.0
        %962 = vmatpush1.msra.mxu0 0.0
        %963 = vmatprep.subr.mxu0 0.0
        %964 = vmatpush1.msra.mxu0 0.0
        %965 = vmatprep.subr.mxu0 0.0
        %966 = vmatpush1.msra.mxu0 0.0
        %967 = vmatprep.subr.mxu0 0.0
        %968 = vmatpush1.msra.mxu0 0.0
        %969 = vmatprep.subr.mxu0 0.0
        %970 = vmatpush1.msra.mxu0 0.0
        %971 = vmatprep.subr.mxu0 0.0
        %972 = vmatpush1.msra.mxu0 0.0
        %973 = vmatprep.subr.mxu0 0.0
        %974 = vmatpush1.msra.mxu0 0.0
        %975 = vmatprep.subr.mxu0 0.0
        %976 = vmatpush1.msra.mxu0 0.0
        %977 = vmatprep.subr.mxu0 0.0
        %978 = vmatpush1.msra.mxu0 0.0
        %979 = vmatprep.subr.mxu0 0.0
        %980 = vmatpush1.msra.mxu0 0.0
        %981 = vmatprep.subr.mxu0 0.0
        %982 = vmatpush1.msra.mxu0 0.0
        %983 = vmatprep.subr.mxu0 0.0
        %984 = vmatpush1.msra.mxu0 0.0
        %985 = vmatprep.subr.mxu0 0.0
        %986 = vmatpush1.msra.mxu0 0.0
        %987 = vmatprep.subr.mxu0 0.0
        %988 = vmatpush1.msra.mxu0 0.0
        %989 = vmatprep.subr.mxu0 0.0
        %990 = vmatpush1.msra.mxu0 0.0
        %991 = vmatprep.subr.mxu0 0.0
        %992 = vmatpush1.msra.mxu0 0.0
        %993 = vmatprep.subr.mxu0 0.0
        %994 = vmatpush1.msra.mxu0 0.0
        %995 = vmatprep.subr.mxu0 0.0
        %996 = vmatpush1.msra.mxu0 0.0
        %997 = vmatprep.subr.mxu0 0.0
        %998 = vmatpush1.msra.mxu0 0.0
        %999 = vmatprep.subr.mxu0 0.0
        %1000 = vmatpush1.msra.mxu0 0.0
        %1001 = vmatprep.subr.mxu0 0.0
        %1002 = vmatpush1.msra.mxu0 0.0
        %1003 = vmatprep.subr.mxu0 0.0
        %1004 = vmatpush1.msra.mxu0 0.0
        %1005 = vmatprep.subr.mxu0 0.0
        %1006 = vmatpush1.msra.mxu0 0.0
        %1007 = vmatprep.subr.mxu0 0.0
        %1008 = vmatpush1.msra.mxu0 0.0
        %1009 = vmatprep.subr.mxu0 0.0
        %1010 = vmatpush1.msra.mxu0 0.0
        %1011 = vmatprep.subr.mxu0 0.0
        %1012 = vmatpush1.msra.mxu0 0.0
        %1013 = vmatprep.subr.mxu0 0.0
        %1014 = vmatpush1.msra.mxu0 0.0
        %1015 = vmatprep.subr.mxu0 0.0
        %1016 = vmatpush1.msra.mxu0 0.0
        %1017 = vmatprep.subr.mxu0 0.0
        %1018 = vmatpush1.msra.mxu0 0.0
        %1019 = vmatprep.mubr.f32.mxu0 0.0
        %v1020 = vand.u32 %v866, 4294901760
        %1021 = vmatmul.mubr.f32.gmra.mrb[0].mxu0 %v1020
        %v1022 = vpop.f32.mrb[0].mxu0
        %v1023 = vadd.f32 %v942, %v1022
        %v1024 = vpop.f32.mrb[0].mxu0
        %1025 = vdwg.mxu0
        %1026 = vmatprep.subr.mxu0 0.0
        %v1027 = vand.u32 %v855, 4294901760
        %v1028 = vsub.f32 %v855, %v1027
        %1029 = vmatpush1.msra.mxu0 %v1028
        %1030 = vmatprep.subr.mxu0 0.0
        %v1031 = vand.u32 %v856, 4294901760
        %v1032 = vsub.f32 %v856, %v1031
        %1033 = vmatpush1.msra.mxu0 %v1032
        %1034 = vmatprep.subr.mxu0 0.0
        %1035 = vmatpush1.msra.mxu0 0.0
        %1036 = vmatprep.subr.mxu0 0.0
        %1037 = vmatpush1.msra.mxu0 0.0
        %1038 = vmatprep.subr.mxu0 0.0
        %1039 = vmatpush1.msra.mxu0 0.0
        %1040 = vmatprep.subr.mxu0 0.0
        %1041 = vmatpush1.msra.mxu0 0.0
        %1042 = vmatprep.subr.mxu0 0.0
        %1043 = vmatpush1.msra.mxu0 0.0
        %1044 = vmatprep.subr.mxu0 0.0
        %1045 = vmatpush1.msra.mxu0 0.0
        %1046 = vmatprep.subr.mxu0 0.0
        %1047 = vmatpush1.msra.mxu0 0.0
        %1048 = vmatprep.subr.mxu0 0.0
        %1049 = vmatpush1.msra.mxu0 0.0
        %1050 = vmatprep.subr.mxu0 0.0
        %1051 = vmatpush1.msra.mxu0 0.0
        %1052 = vmatprep.subr.mxu0 0.0
        %1053 = vmatpush1.msra.mxu0 0.0
        %1054 = vmatprep.subr.mxu0 0.0
        %1055 = vmatpush1.msra.mxu0 0.0
        %1056 = vmatprep.subr.mxu0 0.0
        %1057 = vmatpush1.msra.mxu0 0.0
        %1058 = vmatprep.subr.mxu0 0.0
        %1059 = vmatpush1.msra.mxu0 0.0
        %1060 = vmatprep.subr.mxu0 0.0
        %1061 = vmatpush1.msra.mxu0 0.0
        %1062 = vmatprep.subr.mxu0 0.0
        %1063 = vmatpush1.msra.mxu0 0.0
        %1064 = vmatprep.subr.mxu0 0.0
        %1065 = vmatpush1.msra.mxu0 0.0
        %1066 = vmatprep.subr.mxu0 0.0
        %1067 = vmatpush1.msra.mxu0 0.0
        %1068 = vmatprep.subr.mxu0 0.0
        %1069 = vmatpush1.msra.mxu0 0.0
        %1070 = vmatprep.subr.mxu0 0.0
        %1071 = vmatpush1.msra.mxu0 0.0
        %1072 = vmatprep.subr.mxu0 0.0
        %1073 = vmatpush1.msra.mxu0 0.0
        %1074 = vmatprep.subr.mxu0 0.0
        %1075 = vmatpush1.msra.mxu0 0.0
        %1076 = vmatprep.subr.mxu0 0.0
        %1077 = vmatpush1.msra.mxu0 0.0
        %1078 = vmatprep.subr.mxu0 0.0
        %1079 = vmatpush1.msra.mxu0 0.0
        %1080 = vmatprep.subr.mxu0 0.0
        %1081 = vmatpush1.msra.mxu0 0.0
        %1082 = vmatprep.subr.mxu0 0.0
        %1083 = vmatpush1.msra.mxu0 0.0
        %1084 = vmatprep.subr.mxu0 0.0
        %1085 = vmatpush1.msra.mxu0 0.0
        %1086 = vmatprep.subr.mxu0 0.0
        %1087 = vmatpush1.msra.mxu0 0.0
        %1088 = vmatprep.subr.mxu0 0.0
        %1089 = vmatpush1.msra.mxu0 0.0
        %1090 = vmatprep.subr.mxu0 0.0
        %1091 = vmatpush1.msra.mxu0 0.0
        %1092 = vmatprep.subr.mxu0 0.0
        %1093 = vmatpush1.msra.mxu0 0.0
        %1094 = vmatprep.mubr.f32.mxu0 0.0
        %v1095 = vand.u32 %v866, 4294901760
        %v1096 = vsub.f32 %v866, %v1095
        %1097 = vmatmul.mubr.f32.gmra.mrb[0].mxu0 %v1096
        %v1098 = vpop.f32.mrb[0].mxu0
        %v1099 = vadd.f32 %v1023, %v1098
        %v1100 = vpop.f32.mrb[0].mxu0
        %1101 = vdwg.mxu0
        %1102 = vmatprep.subr.mxu0 0.0
        %v1103 = vand.u32 %v855, 4294901760
        %1104 = vmatpush1.msra.mxu0 %v1103
        %1105 = vmatprep.subr.mxu0 0.0
        %v1106 = vand.u32 %v856, 4294901760
        %1107 = vmatpush1.msra.mxu0 %v1106
        %1108 = vmatprep.subr.mxu0 0.0
        %1109 = vmatpush1.msra.mxu0 0.0
        %1110 = vmatprep.subr.mxu0 0.0
        %1111 = vmatpush1.msra.mxu0 0.0
        %1112 = vmatprep.subr.mxu0 0.0
        %1113 = vmatpush1.msra.mxu0 0.0
        %1114 = vmatprep.subr.mxu0 0.0
        %1115 = vmatpush1.msra.mxu0 0.0
        %1116 = vmatprep.subr.mxu0 0.0
        %1117 = vmatpush1.msra.mxu0 0.0
        %1118 = vmatprep.subr.mxu0 0.0
        %1119 = vmatpush1.msra.mxu0 0.0
        %1120 = vmatprep.subr.mxu0 0.0
        %1121 = vmatpush1.msra.mxu0 0.0
        %1122 = vmatprep.subr.mxu0 0.0
        %1123 = vmatpush1.msra.mxu0 0.0
        %1124 = vmatprep.subr.mxu0 0.0
        %1125 = vmatpush1.msra.mxu0 0.0
        %1126 = vmatprep.subr.mxu0 0.0
        %1127 = vmatpush1.msra.mxu0 0.0
        %1128 = vmatprep.subr.mxu0 0.0
        %1129 = vmatpush1.msra.mxu0 0.0
        %1130 = vmatprep.subr.mxu0 0.0
        %1131 = vmatpush1.msra.mxu0 0.0
        %1132 = vmatprep.subr.mxu0 0.0
        %1133 = vmatpush1.msra.mxu0 0.0
        %1134 = vmatprep.subr.mxu0 0.0
        %1135 = vmatpush1.msra.mxu0 0.0
        %1136 = vmatprep.subr.mxu0 0.0
        %1137 = vmatpush1.msra.mxu0 0.0
        %1138 = vmatprep.subr.mxu0 0.0
        %1139 = vmatpush1.msra.mxu0 0.0
        %1140 = vmatprep.subr.mxu0 0.0
        %1141 = vmatpush1.msra.mxu0 0.0
        %1142 = vmatprep.subr.mxu0 0.0
        %1143 = vmatpush1.msra.mxu0 0.0
        %1144 = vmatprep.subr.mxu0 0.0
        %1145 = vmatpush1.msra.mxu0 0.0
        %1146 = vmatprep.subr.mxu0 0.0
        %1147 = vmatpush1.msra.mxu0 0.0
        %1148 = vmatprep.subr.mxu0 0.0
        %1149 = vmatpush1.msra.mxu0 0.0
        %1150 = vmatprep.subr.mxu0 0.0
        %1151 = vmatpush1.msra.mxu0 0.0
        %1152 = vmatprep.subr.mxu0 0.0
        %1153 = vmatpush1.msra.mxu0 0.0
        %1154 = vmatprep.subr.mxu0 0.0
        %1155 = vmatpush1.msra.mxu0 0.0
        %1156 = vmatprep.subr.mxu0 0.0
        %1157 = vmatpush1.msra.mxu0 0.0
        %1158 = vmatprep.subr.mxu0 0.0
        %1159 = vmatpush1.msra.mxu0 0.0
        %1160 = vmatprep.subr.mxu0 0.0
        %1161 = vmatpush1.msra.mxu0 0.0
        %1162 = vmatprep.subr.mxu0 0.0
        %1163 = vmatpush1.msra.mxu0 0.0
        %1164 = vmatprep.subr.mxu0 0.0
        %1165 = vmatpush1.msra.mxu0 0.0
        %1166 = vmatprep.subr.mxu0 0.0
        %1167 = vmatpush1.msra.mxu0 0.0
        %1168 = vmatprep.mubr.f32.mxu0 0.0
        %v1169 = vand.u32 %v866, 4294901760
        %v1170 = vsub.f32 %v866, %v1169
        %v1171 = vand.u32 %v1170, 4294901760
        %1172 = vmatmul.mubr.f32.gmra.mrb[0].mxu0 %v1171
        %v1173 = vpop.f32.mrb[0].mxu0
        %v1174 = vadd.f32 %v1099, %v1173
        %v1175 = vpop.f32.mrb[0].mxu0
        %1176 = vdwg.mxu0
        %1177 = vmatprep.subr.mxu0 0.0
        %v1178 = vand.u32 %v855, 4294901760
        %v1179 = vsub.f32 %v855, %v1178
        %v1180 = vand.u32 %v1179, 4294901760
        %1181 = vmatpush1.msra.mxu0 %v1180
        %1182 = vmatprep.subr.mxu0 0.0
        %v1183 = vand.u32 %v856, 4294901760
        %v1184 = vsub.f32 %v856, %v1183
        %v1185 = vand.u32 %v1184, 4294901760
        %1186 = vmatpush1.msra.mxu0 %v1185
        %1187 = vmatprep.subr.mxu0 0.0
        %1188 = vmatpush1.msra.mxu0 0.0
        %1189 = vmatprep.subr.mxu0 0.0
        %1190 = vmatpush1.msra.mxu0 0.0
        %1191 = vmatprep.subr.mxu0 0.0
        %1192 = vmatpush1.msra.mxu0 0.0
        %1193 = vmatprep.subr.mxu0 0.0
        %1194 = vmatpush1.msra.mxu0 0.0
        %1195 = vmatprep.subr.mxu0 0.0
        %1196 = vmatpush1.msra.mxu0 0.0
        %1197 = vmatprep.subr.mxu0 0.0
        %1198 = vmatpush1.msra.mxu0 0.0
        %1199 = vmatprep.subr.mxu0 0.0
        %1200 = vmatpush1.msra.mxu0 0.0
        %1201 = vmatprep.subr.mxu0 0.0
        %1202 = vmatpush1.msra.mxu0 0.0
        %1203 = vmatprep.subr.mxu0 0.0
        %1204 = vmatpush1.msra.mxu0 0.0
        %1205 = vmatprep.subr.mxu0 0.0
        %1206 = vmatpush1.msra.mxu0 0.0
        %1207 = vmatprep.subr.mxu0 0.0
        %1208 = vmatpush1.msra.mxu0 0.0
        %1209 = vmatprep.subr.mxu0 0.0
        %1210 = vmatpush1.msra.mxu0 0.0
        %1211 = vmatprep.subr.mxu0 0.0
        %1212 = vmatpush1.msra.mxu0 0.0
        %1213 = vmatprep.subr.mxu0 0.0
        %1214 = vmatpush1.msra.mxu0 0.0
        %1215 = vmatprep.subr.mxu0 0.0
        %1216 = vmatpush1.msra.mxu0 0.0
        %1217 = vmatprep.subr.mxu0 0.0
        %1218 = vmatpush1.msra.mxu0 0.0
        %1219 = vmatprep.subr.mxu0 0.0
        %1220 = vmatpush1.msra.mxu0 0.0
        %1221 = vmatprep.subr.mxu0 0.0
        %1222 = vmatpush1.msra.mxu0 0.0
        %1223 = vmatprep.subr.mxu0 0.0
        %1224 = vmatpush1.msra.mxu0 0.0
        %1225 = vmatprep.subr.mxu0 0.0
        %1226 = vmatpush1.msra.mxu0 0.0
        %1227 = vmatprep.subr.mxu0 0.0
        %1228 = vmatpush1.msra.mxu0 0.0
        %1229 = vmatprep.subr.mxu0 0.0
        %1230 = vmatpush1.msra.mxu0 0.0
        %1231 = vmatprep.subr.mxu0 0.0
        %1232 = vmatpush1.msra.mxu0 0.0
        %1233 = vmatprep.subr.mxu0 0.0
        %1234 = vmatpush1.msra.mxu0 0.0
        %1235 = vmatprep.subr.mxu0 0.0
        %1236 = vmatpush1.msra.mxu0 0.0
        %1237 = vmatprep.subr.mxu0 0.0
        %1238 = vmatpush1.msra.mxu0 0.0
        %1239 = vmatprep.subr.mxu0 0.0
        %1240 = vmatpush1.msra.mxu0 0.0
        %1241 = vmatprep.subr.mxu0 0.0
        %1242 = vmatpush1.msra.mxu0 0.0
        %1243 = vmatprep.subr.mxu0 0.0
        %1244 = vmatpush1.msra.mxu0 0.0
        %1245 = vmatprep.subr.mxu0 0.0
        %1246 = vmatpush1.msra.mxu0 0.0
        %1247 = vmatprep.mubr.f32.mxu0 0.0
        %v1248 = vand.u32 %v866, 4294901760
        %1249 = vmatmul.mubr.f32.gmra.mrb[0].mxu0 %v1248
        %v1250 = vpop.f32.mrb[0].mxu0
        %v1251 = vadd.f32 %v1174, %v1250
        %v1252 = vpop.f32.mrb[0].mxu0
        %1253 = vdwg.mxu0
        %1254 = vmatprep.subr.mxu0 0.0
        %v1255 = vand.u32 %v855, 4294901760
        %1256 = vmatpush1.msra.mxu0 %v1255
        %1257 = vmatprep.subr.mxu0 0.0
        %v1258 = vand.u32 %v856, 4294901760
        %1259 = vmatpush1.msra.mxu0 %v1258
        %1260 = vmatprep.subr.mxu0 0.0
        %1261 = vmatpush1.msra.mxu0 0.0
        %1262 = vmatprep.subr.mxu0 0.0
        %1263 = vmatpush1.msra.mxu0 0.0
        %1264 = vmatprep.subr.mxu0 0.0
        %1265 = vmatpush1.msra.mxu0 0.0
        %1266 = vmatprep.subr.mxu0 0.0
        %1267 = vmatpush1.msra.mxu0 0.0
        %1268 = vmatprep.subr.mxu0 0.0
        %1269 = vmatpush1.msra.mxu0 0.0
        %1270 = vmatprep.subr.mxu0 0.0
        %1271 = vmatpush1.msra.mxu0 0.0
        %1272 = vmatprep.subr.mxu0 0.0
        %1273 = vmatpush1.msra.mxu0 0.0
        %1274 = vmatprep.subr.mxu0 0.0
        %1275 = vmatpush1.msra.mxu0 0.0
        %1276 = vmatprep.subr.mxu0 0.0
        %1277 = vmatpush1.msra.mxu0 0.0
        %1278 = vmatprep.subr.mxu0 0.0
        %1279 = vmatpush1.msra.mxu0 0.0
        %1280 = vmatprep.subr.mxu0 0.0
        %1281 = vmatpush1.msra.mxu0 0.0
        %1282 = vmatprep.subr.mxu0 0.0
        %1283 = vmatpush1.msra.mxu0 0.0
        %1284 = vmatprep.subr.mxu0 0.0
        %1285 = vmatpush1.msra.mxu0 0.0
        %1286 = vmatprep.subr.mxu0 0.0
        %1287 = vmatpush1.msra.mxu0 0.0
        %1288 = vmatprep.subr.mxu0 0.0
        %1289 = vmatpush1.msra.mxu0 0.0
        %1290 = vmatprep.subr.mxu0 0.0
        %1291 = vmatpush1.msra.mxu0 0.0
        %1292 = vmatprep.subr.mxu0 0.0
        %1293 = vmatpush1.msra.mxu0 0.0
        %1294 = vmatprep.subr.mxu0 0.0
        %1295 = vmatpush1.msra.mxu0 0.0
        %1296 = vmatprep.subr.mxu0 0.0
        %1297 = vmatpush1.msra.mxu0 0.0
        %1298 = vmatprep.subr.mxu0 0.0
        %1299 = vmatpush1.msra.mxu0 0.0
        %1300 = vmatprep.subr.mxu0 0.0
        %1301 = vmatpush1.msra.mxu0 0.0
        %1302 = vmatprep.subr.mxu0 0.0
        %1303 = vmatpush1.msra.mxu0 0.0
        %1304 = vmatprep.subr.mxu0 0.0
        %1305 = vmatpush1.msra.mxu0 0.0
        %1306 = vmatprep.subr.mxu0 0.0
        %1307 = vmatpush1.msra.mxu0 0.0
        %1308 = vmatprep.subr.mxu0 0.0
        %1309 = vmatpush1.msra.mxu0 0.0
        %1310 = vmatprep.subr.mxu0 0.0
        %1311 = vmatpush1.msra.mxu0 0.0
        %1312 = vmatprep.subr.mxu0 0.0
        %1313 = vmatpush1.msra.mxu0 0.0
        %1314 = vmatprep.subr.mxu0 0.0
        %1315 = vmatpush1.msra.mxu0 0.0
        %1316 = vmatprep.subr.mxu0 0.0
        %1317 = vmatpush1.msra.mxu0 0.0
        %1318 = vmatprep.subr.mxu0 0.0
        %1319 = vmatpush1.msra.mxu0 0.0
        %1320 = vmatprep.mubr.f32.mxu0 0.0
        %v1321 = vand.u32 %v866, 4294901760
        %1322 = vmatmul.mubr.f32.gmra.mrb[0].mxu0 %v1321
        %v1323 = vpop.f32.mrb[0].mxu0
        %v1324 = vadd.f32 %v1251, %v1323
        %v1325 = vpop.f32.mrb[0].mxu0
        %1326 = vdwg.mxu0
        %v1327 = vmax.f32 %v1324, 0.0
        %v1328 = vld [vmem:[%s5] sm:$0xff]
        %v1329 = vld [vmem:[%s5 + $0x8] sm:$0xff]
        %v1330 = vld [vmem:[%s6] sm:$0x1]
        %v1332 = vlaneseq
        %v1333 = vshrl.u32 %v1332, 7
        %v1334 = vsub.s32 0, %v1333
        %v1335 = vrot.slane %v1330, %v1334
        %v1338 = vsel %vm864, %v1327, 0
        %1340 = vmatprep.subr.mxu0 0.0
        %v1341 = vand.u32 %v1328, 4294901760
        %1342 = vmatpush1.msra.mxu0 %v1341
        %1343 = vmatprep.subr.mxu0 0.0
        %v1344 = vand.u32 %v1329, 4294901760
        %1345 = vmatpush1.msra.mxu0 %v1344
        %1346 = vmatprep.subr.mxu0 0.0
        %1347 = vmatpush1.msra.mxu0 0.0
        %1348 = vmatprep.subr.mxu0 0.0
        %1349 = vmatpush1.msra.mxu0 0.0
        %1350 = vmatprep.subr.mxu0 0.0
        %1351 = vmatpush1.msra.mxu0 0.0
        %1352 = vmatprep.subr.mxu0 0.0
        %1353 = vmatpush1.msra.mxu0 0.0
        %1354 = vmatprep.subr.mxu0 0.0
        %1355 = vmatpush1.msra.mxu0 0.0
        %1356 = vmatprep.subr.mxu0 0.0
        %1357 = vmatpush1.msra.mxu0 0.0
        %1358 = vmatprep.subr.mxu0 0.0
        %1359 = vmatpush1.msra.mxu0 0.0
        %1360 = vmatprep.subr.mxu0 0.0
        %1361 = vmatpush1.msra.mxu0 0.0
        %1362 = vmatprep.subr.mxu0 0.0
        %1363 = vmatpush1.msra.mxu0 0.0
        %1364 = vmatprep.subr.mxu0 0.0
        %1365 = vmatpush1.msra.mxu0 0.0
        %1366 = vmatprep.subr.mxu0 0.0
        %1367 = vmatpush1.msra.mxu0 0.0
        %1368 = vmatprep.subr.mxu0 0.0
        %1369 = vmatpush1.msra.mxu0 0.0
        %1370 = vmatprep.subr.mxu0 0.0
        %1371 = vmatpush1.msra.mxu0 0.0
        %1372 = vmatprep.subr.mxu0 0.0
        %1373 = vmatpush1.msra.mxu0 0.0
        %1374 = vmatprep.subr.mxu0 0.0
        %1375 = vmatpush1.msra.mxu0 0.0
        %1376 = vmatprep.subr.mxu0 0.0
        %1377 = vmatpush1.msra.mxu0 0.0
        %1378 = vmatprep.subr.mxu0 0.0
        %1379 = vmatpush1.msra.mxu0 0.0
        %1380 = vmatprep.subr.mxu0 0.0
        %1381 = vmatpush1.msra.mxu0 0.0
        %1382 = vmatprep.subr.mxu0 0.0
        %1383 = vmatpush1.msra.mxu0 0.0
        %1384 = vmatprep.subr.mxu0 0.0
        %1385 = vmatpush1.msra.mxu0 0.0
        %1386 = vmatprep.subr.mxu0 0.0
        %1387 = vmatpush1.msra.mxu0 0.0
        %1388 = vmatprep.subr.mxu0 0.0
        %1389 = vmatpush1.msra.mxu0 0.0
        %1390 = vmatprep.subr.mxu0 0.0
        %1391 = vmatpush1.msra.mxu0 0.0
        %1392 = vmatprep.subr.mxu0 0.0
        %1393 = vmatpush1.msra.mxu0 0.0
        %1394 = vmatprep.subr.mxu0 0.0
        %1395 = vmatpush1.msra.mxu0 0.0
        %1396 = vmatprep.subr.mxu0 0.0
        %1397 = vmatpush1.msra.mxu0 0.0
        %1398 = vmatprep.subr.mxu0 0.0
        %1399 = vmatpush1.msra.mxu0 0.0
        %1400 = vmatprep.subr.mxu0 0.0
        %1401 = vmatpush1.msra.mxu0 0.0
        %1402 = vmatprep.subr.mxu0 0.0
        %1403 = vmatpush1.msra.mxu0 0.0
        %1404 = vmatprep.subr.mxu0 0.0
        %1405 = vmatpush1.msra.mxu0 0.0
        %1406 = vmatprep.mubr.f32.mxu0 0.0
        %v1407 = vand.u32 %v1338, 4294901760
        %v1408 = vsub.f32 %v1338, %v1407
        %v1409 = vand.u32 %v1408, 4294901760
        %v1410 = vsub.f32 %v1408, %v1409
        %v1411 = vand.u32 %v1410, 4294901760
        %1412 = vmatmul.mubr.f32.gmra.mrb[0].mxu0 %v1411
        %v1413 = vpop.f32.mrb[0].mxu0
        %v1414 = vadd.f32 %v1335, %v1413
        %v1415 = vpop.f32.mrb[0].mxu0
        %1416 = vdwg.mxu0
        %1417 = vmatprep.subr.mxu0 0.0
        %v1418 = vand.u32 %v1328, 4294901760
        %v1419 = vsub.f32 %v1328, %v1418
        %v1420 = vand.u32 %v1419, 4294901760
        %v1421 = vsub.f32 %v1419, %v1420
        %v1422 = vand.u32 %v1421, 4294901760
        %1423 = vmatpush1.msra.mxu0 %v1422
        %1424 = vmatprep.subr.mxu0 0.0
        %v1425 = vand.u32 %v1329, 4294901760
        %v1426 = vsub.f32 %v1329, %v1425
        %v1427 = vand.u32 %v1426, 4294901760
        %v1428 = vsub.f32 %v1426, %v1427
        %v1429 = vand.u32 %v1428, 4294901760
        %1430 = vmatpush1.msra.mxu0 %v1429
        %1431 = vmatprep.subr.mxu0 0.0
        %1432 = vmatpush1.msra.mxu0 0.0
        %1433 = vmatprep.subr.mxu0 0.0
        %1434 = vmatpush1.msra.mxu0 0.0
        %1435 = vmatprep.subr.mxu0 0.0
        %1436 = vmatpush1.msra.mxu0 0.0
        %1437 = vmatprep.subr.mxu0 0.0
        %1438 = vmatpush1.msra.mxu0 0.0
        %1439 = vmatprep.subr.mxu0 0.0
        %1440 = vmatpush1.msra.mxu0 0.0
        %1441 = vmatprep.subr.mxu0 0.0
        %1442 = vmatpush1.msra.mxu0 0.0
        %1443 = vmatprep.subr.mxu0 0.0
        %1444 = vmatpush1.msra.mxu0 0.0
        %1445 = vmatprep.subr.mxu0 0.0
        %1446 = vmatpush1.msra.mxu0 0.0
        %1447 = vmatprep.subr.mxu0 0.0
        %1448 = vmatpush1.msra.mxu0 0.0
        %1449 = vmatprep.subr.mxu0 0.0
        %1450 = vmatpush1.msra.mxu0 0.0
        %1451 = vmatprep.subr.mxu0 0.0
        %1452 = vmatpush1.msra.mxu0 0.0
        %1453 = vmatprep.subr.mxu0 0.0
        %1454 = vmatpush1.msra.mxu0 0.0
        %1455 = vmatprep.subr.mxu0 0.0
        %1456 = vmatpush1.msra.mxu0 0.0
        %1457 = vmatprep.subr.mxu0 0.0
        %1458 = vmatpush1.msra.mxu0 0.0
        %1459 = vmatprep.subr.mxu0 0.0
        %1460 = vmatpush1.msra.mxu0 0.0
        %1461 = vmatprep.subr.mxu0 0.0
        %1462 = vmatpush1.msra.mxu0 0.0
        %1463 = vmatprep.subr.mxu0 0.0
        %1464 = vmatpush1.msra.mxu0 0.0
        %1465 = vmatprep.subr.mxu0 0.0
        %1466 = vmatpush1.msra.mxu0 0.0
        %1467 = vmatprep.subr.mxu0 0.0
        %1468 = vmatpush1.msra.mxu0 0.0
        %1469 = vmatprep.subr.mxu0 0.0
        %1470 = vmatpush1.msra.mxu0 0.0
        %1471 = vmatprep.subr.mxu0 0.0
        %1472 = vmatpush1.msra.mxu0 0.0
        %1473 = vmatprep.subr.mxu0 0.0
        %1474 = vmatpush1.msra.mxu0 0.0
        %1475 = vmatprep.subr.mxu0 0.0
        %1476 = vmatpush1.msra.mxu0 0.0
        %1477 = vmatprep.subr.mxu0 0.0
        %1478 = vmatpush1.msra.mxu0 0.0
        %1479 = vmatprep.subr.mxu0 0.0
        %1480 = vmatpush1.msra.mxu0 0.0
        %1481 = vmatprep.subr.mxu0 0.0
        %1482 = vmatpush1.msra.mxu0 0.0
        %1483 = vmatprep.subr.mxu0 0.0
        %1484 = vmatpush1.msra.mxu0 0.0
        %1485 = vmatprep.subr.mxu0 0.0
        %1486 = vmatpush1.msra.mxu0 0.0
        %1487 = vmatprep.subr.mxu0 0.0
        %1488 = vmatpush1.msra.mxu0 0.0
        %1489 = vmatprep.subr.mxu0 0.0
        %1490 = vmatpush1.msra.mxu0 0.0
        %1491 = vmatprep.mubr.f32.mxu0 0.0
        %v1492 = vand.u32 %v1338, 4294901760
        %1493 = vmatmul.mubr.f32.gmra.mrb[0].mxu0 %v1492
        %v1494 = vpop.f32.mrb[0].mxu0
        %v1495 = vadd.f32 %v1414, %v1494
        %v1496 = vpop.f32.mrb[0].mxu0
        %1497 = vdwg.mxu0
        %1498 = vmatprep.subr.mxu0 0.0
        %v1499 = vand.u32 %v1328, 4294901760
        %v1500 = vsub.f32 %v1328, %v1499
        %1501 = vmatpush1.msra.mxu0 %v1500
        %1502 = vmatprep.subr.mxu0 0.0
        %v1503 = vand.u32 %v1329, 4294901760
        %v1504 = vsub.f32 %v1329, %v1503
        %1505 = vmatpush1.msra.mxu0 %v1504
        %1506 = vmatprep.subr.mxu0 0.0
        %1507 = vmatpush1.msra.mxu0 0.0
        %1508 = vmatprep.subr.mxu0 0.0
        %1509 = vmatpush1.msra.mxu0 0.0
        %1510 = vmatprep.subr.mxu0 0.0
        %1511 = vmatpush1.msra.mxu0 0.0
        %1512 = vmatprep.subr.mxu0 0.0
        %1513 = vmatpush1.msra.mxu0 0.0
        %1514 = vmatprep.subr.mxu0 0.0
        %1515 = vmatpush1.msra.mxu0 0.0
        %1516 = vmatprep.subr.mxu0 0.0
        %1517 = vmatpush1.msra.mxu0 0.0
        %1518 = vmatprep.subr.mxu0 0.0
        %1519 = vmatpush1.msra.mxu0 0.0
        %1520 = vmatprep.subr.mxu0 0.0
        %1521 = vmatpush1.msra.mxu0 0.0
        %1522 = vmatprep.subr.mxu0 0.0
        %1523 = vmatpush1.msra.mxu0 0.0
        %1524 = vmatprep.subr.mxu0 0.0
        %1525 = vmatpush1.msra.mxu0 0.0
        %1526 = vmatprep.subr.mxu0 0.0
        %1527 = vmatpush1.msra.mxu0 0.0
        %1528 = vmatprep.subr.mxu0 0.0
        %1529 = vmatpush1.msra.mxu0 0.0
        %1530 = vmatprep.subr.mxu0 0.0
        %1531 = vmatpush1.msra.mxu0 0.0
        %1532 = vmatprep.subr.mxu0 0.0
        %1533 = vmatpush1.msra.mxu0 0.0
        %1534 = vmatprep.subr.mxu0 0.0
        %1535 = vmatpush1.msra.mxu0 0.0
        %1536 = vmatprep.subr.mxu0 0.0
        %1537 = vmatpush1.msra.mxu0 0.0
        %1538 = vmatprep.subr.mxu0 0.0
        %1539 = vmatpush1.msra.mxu0 0.0
        %1540 = vmatprep.subr.mxu0 0.0
        %1541 = vmatpush1.msra.mxu0 0.0
        %1542 = vmatprep.subr.mxu0 0.0
        %1543 = vmatpush1.msra.mxu0 0.0
        %1544 = vmatprep.subr.mxu0 0.0
        %1545 = vmatpush1.msra.mxu0 0.0
        %1546 = vmatprep.subr.mxu0 0.0
        %1547 = vmatpush1.msra.mxu0 0.0
        %1548 = vmatprep.subr.mxu0 0.0
        %1549 = vmatpush1.msra.mxu0 0.0
        %1550 = vmatprep.subr.mxu0 0.0
        %1551 = vmatpush1.msra.mxu0 0.0
        %1552 = vmatprep.subr.mxu0 0.0
        %1553 = vmatpush1.msra.mxu0 0.0
        %1554 = vmatprep.subr.mxu0 0.0
        %1555 = vmatpush1.msra.mxu0 0.0
        %1556 = vmatprep.subr.mxu0 0.0
        %1557 = vmatpush1.msra.mxu0 0.0
        %1558 = vmatprep.subr.mxu0 0.0
        %1559 = vmatpush1.msra.mxu0 0.0
        %1560 = vmatprep.subr.mxu0 0.0
        %1561 = vmatpush1.msra.mxu0 0.0
        %1562 = vmatprep.subr.mxu0 0.0
        %1563 = vmatpush1.msra.mxu0 0.0
        %1564 = vmatprep.subr.mxu0 0.0
        %1565 = vmatpush1.msra.mxu0 0.0
        %1566 = vmatprep.mubr.f32.mxu0 0.0
        %v1567 = vand.u32 %v1338, 4294901760
        %v1568 = vsub.f32 %v1338, %v1567
        %1569 = vmatmul.mubr.f32.gmra.mrb[0].mxu0 %v1568
        %v1570 = vpop.f32.mrb[0].mxu0
        %v1571 = vadd.f32 %v1495, %v1570
        %v1572 = vpop.f32.mrb[0].mxu0
        %1573 = vdwg.mxu0
        %1574 = vmatprep.subr.mxu0 0.0
        %v1575 = vand.u32 %v1328, 4294901760
        %1576 = vmatpush1.msra.mxu0 %v1575
        %1577 = vmatprep.subr.mxu0 0.0
        %v1578 = vand.u32 %v1329, 4294901760
        %1579 = vmatpush1.msra.mxu0 %v1578
        %1580 = vmatprep.subr.mxu0 0.0
        %1581 = vmatpush1.msra.mxu0 0.0
        %1582 = vmatprep.subr.mxu0 0.0
        %1583 = vmatpush1.msra.mxu0 0.0
        %1584 = vmatprep.subr.mxu0 0.0
        %1585 = vmatpush1.msra.mxu0 0.0
        %1586 = vmatprep.subr.mxu0 0.0
        %1587 = vmatpush1.msra.mxu0 0.0
        %1588 = vmatprep.subr.mxu0 0.0
        %1589 = vmatpush1.msra.mxu0 0.0
        %1590 = vmatprep.subr.mxu0 0.0
        %1591 = vmatpush1.msra.mxu0 0.0
        %1592 = vmatprep.subr.mxu0 0.0
        %1593 = vmatpush1.msra.mxu0 0.0
        %1594 = vmatprep.subr.mxu0 0.0
        %1595 = vmatpush1.msra.mxu0 0.0
        %1596 = vmatprep.subr.mxu0 0.0
        %1597 = vmatpush1.msra.mxu0 0.0
        %1598 = vmatprep.subr.mxu0 0.0
        %1599 = vmatpush1.msra.mxu0 0.0
        %1600 = vmatprep.subr.mxu0 0.0
        %1601 = vmatpush1.msra.mxu0 0.0
        %1602 = vmatprep.subr.mxu0 0.0
        %1603 = vmatpush1.msra.mxu0 0.0
        %1604 = vmatprep.subr.mxu0 0.0
        %1605 = vmatpush1.msra.mxu0 0.0
        %1606 = vmatprep.subr.mxu0 0.0
        %1607 = vmatpush1.msra.mxu0 0.0
        %1608 = vmatprep.subr.mxu0 0.0
        %1609 = vmatpush1.msra.mxu0 0.0
        %1610 = vmatprep.subr.mxu0 0.0
        %1611 = vmatpush1.msra.mxu0 0.0
        %1612 = vmatprep.subr.mxu0 0.0
        %1613 = vmatpush1.msra.mxu0 0.0
        %1614 = vmatprep.subr.mxu0 0.0
        %1615 = vmatpush1.msra.mxu0 0.0
        %1616 = vmatprep.subr.mxu0 0.0
        %1617 = vmatpush1.msra.mxu0 0.0
        %1618 = vmatprep.subr.mxu0 0.0
        %1619 = vmatpush1.msra.mxu0 0.0
        %1620 = vmatprep.subr.mxu0 0.0
        %1621 = vmatpush1.msra.mxu0 0.0
        %1622 = vmatprep.subr.mxu0 0.0
        %1623 = vmatpush1.msra.mxu0 0.0
        %1624 = vmatprep.subr.mxu0 0.0
        %1625 = vmatpush1.msra.mxu0 0.0
        %1626 = vmatprep.subr.mxu0 0.0
        %1627 = vmatpush1.msra.mxu0 0.0
        %1628 = vmatprep.subr.mxu0 0.0
        %1629 = vmatpush1.msra.mxu0 0.0
        %1630 = vmatprep.subr.mxu0 0.0
        %1631 = vmatpush1.msra.mxu0 0.0
        %1632 = vmatprep.subr.mxu0 0.0
        %1633 = vmatpush1.msra.mxu0 0.0
        %1634 = vmatprep.subr.mxu0 0.0
        %1635 = vmatpush1.msra.mxu0 0.0
        %1636 = vmatprep.subr.mxu0 0.0
        %1637 = vmatpush1.msra.mxu0 0.0
        %1638 = vmatprep.subr.mxu0 0.0
        %1639 = vmatpush1.msra.mxu0 0.0
        %1640 = vmatprep.mubr.f32.mxu0 0.0
        %v1641 = vand.u32 %v1338, 4294901760
        %v1642 = vsub.f32 %v1338, %v1641
        %v1643 = vand.u32 %v1642, 4294901760
        %1644 = vmatmul.mubr.f32.gmra.mrb[0].mxu0 %v1643
        %v1645 = vpop.f32.mrb[0].mxu0
        %v1646 = vadd.f32 %v1571, %v1645
        %v1647 = vpop.f32.mrb[0].mxu0
        %1648 = vdwg.mxu0
        %1649 = vmatprep.subr.mxu0 0.0
        %v1650 = vand.u32 %v1328, 4294901760
        %v1651 = vsub.f32 %v1328, %v1650
        %v1652 = vand.u32 %v1651, 4294901760
        %1653 = vmatpush1.msra.mxu0 %v1652
        %1654 = vmatprep.subr.mxu0 0.0
        %v1655 = vand.u32 %v1329, 4294901760
        %v1656 = vsub.f32 %v1329, %v1655
        %v1657 = vand.u32 %v1656, 4294901760
        %1658 = vmatpush1.msra.mxu0 %v1657
        %1659 = vmatprep.subr.mxu0 0.0
        %1660 = vmatpush1.msra.mxu0 0.0
        %1661 = vmatprep.subr.mxu0 0.0
        %1662 = vmatpush1.msra.mxu0 0.0
        %1663 = vmatprep.subr.mxu0 0.0
        %1664 = vmatpush1.msra.mxu0 0.0
        %1665 = vmatprep.subr.mxu0 0.0
        %1666 = vmatpush1.msra.mxu0 0.0
        %1667 = vmatprep.subr.mxu0 0.0
        %1668 = vmatpush1.msra.mxu0 0.0
        %1669 = vmatprep.subr.mxu0 0.0
        %1670 = vmatpush1.msra.mxu0 0.0
        %1671 = vmatprep.subr.mxu0 0.0
        %1672 = vmatpush1.msra.mxu0 0.0
        %1673 = vmatprep.subr.mxu0 0.0
        %1674 = vmatpush1.msra.mxu0 0.0
        %1675 = vmatprep.subr.mxu0 0.0
        %1676 = vmatpush1.msra.mxu0 0.0
        %1677 = vmatprep.subr.mxu0 0.0
        %1678 = vmatpush1.msra.mxu0 0.0
        %1679 = vmatprep.subr.mxu0 0.0
        %1680 = vmatpush1.msra.mxu0 0.0
        %1681 = vmatprep.subr.mxu0 0.0
        %1682 = vmatpush1.msra.mxu0 0.0
        %1683 = vmatprep.subr.mxu0 0.0
        %1684 = vmatpush1.msra.mxu0 0.0
        %1685 = vmatprep.subr.mxu0 0.0
        %1686 = vmatpush1.msra.mxu0 0.0
        %1687 = vmatprep.subr.mxu0 0.0
        %1688 = vmatpush1.msra.mxu0 0.0
        %1689 = vmatprep.subr.mxu0 0.0
        %1690 = vmatpush1.msra.mxu0 0.0
        %1691 = vmatprep.subr.mxu0 0.0
        %1692 = vmatpush1.msra.mxu0 0.0
        %1693 = vmatprep.subr.mxu0 0.0
        %1694 = vmatpush1.msra.mxu0 0.0
        %1695 = vmatprep.subr.mxu0 0.0
        %1696 = vmatpush1.msra.mxu0 0.0
        %1697 = vmatprep.subr.mxu0 0.0
        %1698 = vmatpush1.msra.mxu0 0.0
        %1699 = vmatprep.subr.mxu0 0.0
        %1700 = vmatpush1.msra.mxu0 0.0
        %1701 = vmatprep.subr.mxu0 0.0
        %1702 = vmatpush1.msra.mxu0 0.0
        %1703 = vmatprep.subr.mxu0 0.0
        %1704 = vmatpush1.msra.mxu0 0.0
        %1705 = vmatprep.subr.mxu0 0.0
        %1706 = vmatpush1.msra.mxu0 0.0
        %1707 = vmatprep.subr.mxu0 0.0
        %1708 = vmatpush1.msra.mxu0 0.0
        %1709 = vmatprep.subr.mxu0 0.0
        %1710 = vmatpush1.msra.mxu0 0.0
        %1711 = vmatprep.subr.mxu0 0.0
        %1712 = vmatpush1.msra.mxu0 0.0
        %1713 = vmatprep.subr.mxu0 0.0
        %1714 = vmatpush1.msra.mxu0 0.0
        %1715 = vmatprep.subr.mxu0 0.0
        %1716 = vmatpush1.msra.mxu0 0.0
        %1717 = vmatprep.subr.mxu0 0.0
        %1718 = vmatpush1.msra.mxu0 0.0
        %1719 = vmatprep.mubr.f32.mxu0 0.0
        %v1720 = vand.u32 %v1338, 4294901760
        %1721 = vmatmul.mubr.f32.gmra.mrb[0].mxu0 %v1720
        %v1722 = vpop.f32.mrb[0].mxu0
        %v1723 = vadd.f32 %v1646, %v1722
        %v1724 = vpop.f32.mrb[0].mxu0
        %1725 = vdwg.mxu0
        %1726 = vmatprep.subr.mxu0 0.0
        %v1727 = vand.u32 %v1328, 4294901760
        %1728 = vmatpush1.msra.mxu0 %v1727
        %1729 = vmatprep.subr.mxu0 0.0
        %v1730 = vand.u32 %v1329, 4294901760
        %1731 = vmatpush1.msra.mxu0 %v1730
        %1732 = vmatprep.subr.mxu0 0.0
        %1733 = vmatpush1.msra.mxu0 0.0
        %1734 = vmatprep.subr.mxu0 0.0
        %1735 = vmatpush1.msra.mxu0 0.0
        %1736 = vmatprep.subr.mxu0 0.0
        %1737 = vmatpush1.msra.mxu0 0.0
        %1738 = vmatprep.subr.mxu0 0.0
        %1739 = vmatpush1.msra.mxu0 0.0
        %1740 = vmatprep.subr.mxu0 0.0
        %1741 = vmatpush1.msra.mxu0 0.0
        %1742 = vmatprep.subr.mxu0 0.0
        %1743 = vmatpush1.msra.mxu0 0.0
        %1744 = vmatprep.subr.mxu0 0.0
        %1745 = vmatpush1.msra.mxu0 0.0
        %1746 = vmatprep.subr.mxu0 0.0
        %1747 = vmatpush1.msra.mxu0 0.0
        %1748 = vmatprep.subr.mxu0 0.0
        %1749 = vmatpush1.msra.mxu0 0.0
        %1750 = vmatprep.subr.mxu0 0.0
        %1751 = vmatpush1.msra.mxu0 0.0
        %1752 = vmatprep.subr.mxu0 0.0
        %1753 = vmatpush1.msra.mxu0 0.0
        %1754 = vmatprep.subr.mxu0 0.0
        %1755 = vmatpush1.msra.mxu0 0.0
        %1756 = vmatprep.subr.mxu0 0.0
        %1757 = vmatpush1.msra.mxu0 0.0
        %1758 = vmatprep.subr.mxu0 0.0
        %1759 = vmatpush1.msra.mxu0 0.0
        %1760 = vmatprep.subr.mxu0 0.0
        %1761 = vmatpush1.msra.mxu0 0.0
        %1762 = vmatprep.subr.mxu0 0.0
        %1763 = vmatpush1.msra.mxu0 0.0
        %1764 = vmatprep.subr.mxu0 0.0
        %1765 = vmatpush1.msra.mxu0 0.0
        %1766 = vmatprep.subr.mxu0 0.0
        %1767 = vmatpush1.msra.mxu0 0.0
        %1768 = vmatprep.subr.mxu0 0.0
        %1769 = vmatpush1.msra.mxu0 0.0
        %1770 = vmatprep.subr.mxu0 0.0
        %1771 = vmatpush1.msra.mxu0 0.0
        %1772 = vmatprep.subr.mxu0 0.0
        %1773 = vmatpush1.msra.mxu0 0.0
        %1774 = vmatprep.subr.mxu0 0.0
        %1775 = vmatpush1.msra.mxu0 0.0
        %1776 = vmatprep.subr.mxu0 0.0
        %1777 = vmatpush1.msra.mxu0 0.0
        %1778 = vmatprep.subr.mxu0 0.0
        %1779 = vmatpush1.msra.mxu0 0.0
        %1780 = vmatprep.subr.mxu0 0.0
        %1781 = vmatpush1.msra.mxu0 0.0
        %1782 = vmatprep.subr.mxu0 0.0
        %1783 = vmatpush1.msra.mxu0 0.0
        %1784 = vmatprep.subr.mxu0 0.0
        %1785 = vmatpush1.msra.mxu0 0.0
        %1786 = vmatprep.subr.mxu0 0.0
        %1787 = vmatpush1.msra.mxu0 0.0
        %1788 = vmatprep.subr.mxu0 0.0
        %1789 = vmatpush1.msra.mxu0 0.0
        %1790 = vmatprep.subr.mxu0 0.0
        %1791 = vmatpush1.msra.mxu0 0.0
        %1792 = vmatprep.mubr.f32.mxu0 0.0
        %v1793 = vand.u32 %v1338, 4294901760
        %1794 = vmatmul.mubr.f32.gmra.mrb[0].mxu0 %v1793
        %v1795 = vpop.f32.mrb[0].mxu0
        %v1796 = vadd.f32 %v1723, %v1795
        %v1797 = vpop.f32.mrb[0].mxu0
        %1798 = vdwg.mxu0
        %v1799 = vlaneseq
        %v1800 = vand.u32 %v1799, 127
        %vm1801 = vcmp.lt.s32.totalorder %v1800, 50
        %v1802 = vsel %vm1801, %v1796, -1e+30
        %1803 = vmax.xlane.f32.xlu0 %v1802
        %v1804 = vpop.xlane.xlu0 %1803
        %v1805 = vsub.f32 %v1802, %v1804
        %v1806 = vmul.f32 %v1805, 1.442695
        %v1807 = vpow.pop %v1806
        %1808 = vadd.xlane.f32.xlu0 %v1807
        %v1809 = vpop.xlane.xlu0 %1808
        %v1810 = vrcp.pop %v1809
        %v1811 = vmul.f32 1.0, %v1810
        %v1812 = vmul.f32 %v1807, %v1811
        %v1813 = vld [vmem:[%s7] sm:$0x1]
        %v1815 = vlaneseq
        %v1816 = vshrl.u32 %v1815, 7
        %v1817 = vsub.s32 0, %v1816
        %v1818 = vrot.slane %v1813, %v1817
        %v1820 = vmul.f32 %v1812, %v1818
        %1821 = vadd.xlane.f32.xlu0 %v1820
        %v1822 = vpop.xlane.xlu0 %1821
        %v1823 = vmul.f32 %v1822, 100.0
        %1824 = vst [vmem:[%s324] sm:$0xff] %v1796
        %vm1825 = vcmask 7168
        %1826 = vst.msk [vmem:[%s338] sm:$0xff] %vm1825, %v1823
        %s1827 = sand.u32 %s205, 1
        %s1828 = scalar_lea.sflag [#allocation3], %s1827
        %s1829 = sand.u32 %s205, 1
        %s1830 = smul.addr %s1829, 8
        %s1831 = scalar_lea.vmem [#allocation2], %s1830
        %p1832 = scmp.lt.s32.totalorder %s24, 1
        %s1833 = scalar_select %p1832, %s24, 1
        %s1834 = smul.addr %s1833, 8
        %s1835 = scalar_lea.vmem %s9, %s1834
        // Predicated region
        $region53: #{tpu_custom_call.1} parent=51 // pred_check
          %p1836 = pneg %p215
        $region54: #{tpu_custom_call.1} parent=51 // pred_check_branch
          %1838 = sbr.rel (%p1836) target = $region56
        $region55: #{tpu_custom_call.1} parent=51 // pred_region
          %s1840 = ssub.s32 128, 128
          %1841 = vsyncadd %s1828, %s1840
          %s1842 = smul.addr %s24, 128
          %s1843 = scalar_lea.hbm %s8, %s1842
          %s1845 = sshll.u32 %s1831, 4
          %s1846 = int_to_ptr.vmem [resolvable:$true] %s1845
          %1848 = dma.vmem_to_hbm [thread:$0]  %s1846, 128, %s1843, %s1828
        $region56: #{tpu_custom_call.1} parent=51 // pred_fallthru
          _
        // Predicated region
        $region57: #{tpu_custom_call.1} parent=51 // pred_check
          %p1849 = pneg %p241
        $region58: #{tpu_custom_call.1} parent=51 // pred_check_branch
          %1851 = sbr.rel (%p1849) target = $region60
        $region59: #{tpu_custom_call.1} parent=51 // pred_region
          _
        $region60: #{tpu_custom_call.1} parent=51 // pred_fallthru
          _
      $region52: #{tpu_custom_call.1} parent=5 // pred_fallthru
        _
      %p1852 = scmp.le.s32.totalorder 2, %s19
      // Predicated region
      $region61: #{tpu_custom_call.1} parent=5 // pred_check
        %p1853 = pneg %p1852
      $region62: #{tpu_custom_call.1} parent=5 // pred_check_branch
        %1855 = sbr.rel (%p1853) target = $region64
      $region63: #{tpu_custom_call.1} parent=5 // pred_region
        %s1856 = ssub.s32 %s19, 2
        // Predicated region
        $region65: #{tpu_custom_call.1} parent=63 // pred_check
          %p1857 = pneg %p221
        $region66: #{tpu_custom_call.1} parent=63 // pred_check_branch
          %1859 = sbr.rel (%p1857) target = $region68
        $region67: #{tpu_custom_call.1} parent=63 // pred_region
          %s1860 = sand.u32 %s206, 1
          %s1861 = scalar_lea.sflag [#allocation3], %s1860
          %s1862 = sand.u32 %s206, 1
          %s1863 = smul.addr %s1862, 8
          %s1864 = scalar_lea.vmem [#allocation2], %s1863
          %1865 = dma.done %s1861, 128
        $region68: #{tpu_custom_call.1} parent=63 // pred_fallthru
          _
        // Predicated region
        $region69: #{tpu_custom_call.1} parent=63 // pred_check
          %p1866 = pneg %p247
        $region70: #{tpu_custom_call.1} parent=63 // pred_check_branch
          %1868 = sbr.rel (%p1866) target = $region72
        $region71: #{tpu_custom_call.1} parent=63 // pred_region
          %p1869 = scmp.lt.s32.totalorder %s25, 1
          %s1870 = scalar_select %p1869, %s25, 1
          %s1871 = smul.addr %s1870, 8
          %s1872 = scalar_lea.vmem %s9, %s1871
        $region72: #{tpu_custom_call.1} parent=63 // pred_fallthru
          _
      $region64: #{tpu_custom_call.1} parent=5 // pred_fallthru
        _
    $region6: #{tpu_custom_call.1} parent=1 // loop_footer
      %s23 = sadd.s32 1, %s19
    $region7: #{tpu_custom_call.1} parent=1 // loop_footer_branch
      %18 = sbr.rel target = $region3
    $region8: #{tpu_custom_call.1} parent=1 // loop_exit
      _
    %1873 = vsyncpa [#allocation3], 1
    %s1874 = scalar_lea.sflag [#allocation3], 1
    %1875 = vsyncpa %s1874, 1

</llo_original>
